<compile_context>
chip_gen: v7x
topology: tpu7x:2x2x1
jax: 0.10.0
libtpu: 0.0.40
codegen_flags: <defaults>
</compile_context>

<pallas_src>
import math

import jax
import jax.numpy as jnp
from jax.experimental import pallas as pl
from jax.experimental.pallas import tpu as pltpu


def _round_up(n, m):
    return ((n + m - 1) // m) * m


# ---------------------------------------------------------------------------
# Kernel 1: encoder (K-chunked over d_in) + fused mean|logvar head +
#           reparameterize + decoder layer 1.  Emits h2 (bf16), ms, z.
# Grid: (batch_tiles, d_in_chunks); chunk axis is a reduction ("arbitrary").
# ---------------------------------------------------------------------------
def _enc_kernel(x_ref, eps_ref, enc_w_ref, enc_b_ref,
                head_w_ref, head_b_ref, dec1_w_ref, dec1_b_ref,
                h2_ref, ms_ref, z_ref, h1_acc):
    k = pl.program_id(1)

    @pl.when(k == 0)
    def _():
        h1_acc[...] = jnp.zeros_like(h1_acc)

    # K-chunk of encoder Linear(d_in, hidden): bf16 MXU, f32 accumulate.
    h1_acc[...] += jnp.dot(x_ref[...], enc_w_ref[...],
                           preferred_element_type=jnp.float32)

    @pl.when(k == pl.num_programs(1) - 1)
    def _():
        l_pad = head_w_ref.shape[1] // 2
        h1 = jnp.maximum(h1_acc[...] + enc_b_ref[...], 0.0)          # ReLU

        # Fused mean|logvar head: one Linear(hidden, 2*l_pad).
        ms = jnp.dot(h1.astype(jnp.bfloat16), head_w_ref[...],
                     preferred_element_type=jnp.float32) + head_b_ref[...]
        mean = ms[:, :l_pad]
        logvar = ms[:, l_pad:]

        # Reparameterize: z = mean + eps * exp(0.5 * logvar).
        z = mean + eps_ref[...] * jnp.exp(0.5 * logvar)

        # Decoder layer 1: Linear(latent, hidden) + ReLU.
        h2 = jnp.dot(z.astype(jnp.bfloat16), dec1_w_ref[...],
                     preferred_element_type=jnp.float32) + dec1_b_ref[...]
        h2 = jnp.maximum(h2, 0.0)

        h2_ref[...] = h2.astype(h2_ref.dtype)
        ms_ref[...] = ms
        z_ref[...] = z


# ---------------------------------------------------------------------------
# Kernel 2: decoder layer 2 (N-chunked over d_in) + sigmoid.
# Grid: (batch_tiles, d_in_chunks); both axes fully parallel.
# ---------------------------------------------------------------------------
def _dec_kernel(h2_ref, dec2_w_ref, dec2_b_ref, recon_ref):
    logits = jnp.dot(h2_ref[...], dec2_w_ref[...],
                     preferred_element_type=jnp.float32) + dec2_b_ref[...]
    # Numerically-stable sigmoid via tanh: EUP slot, no divide, no inf temps.
    recon_ref[...] = 0.5 * (jnp.tanh(0.5 * logits) + 1.0)


def _vmem_limit_bytes():
    """Per-generation VMEM budget: ~96-100 MiB on 128-MiB parts, ~48 MiB on v7x."""
    try:
        cap = int(pltpu.get_tpu_info().vmem_capacity_bytes)
    except Exception:  # query unavailable -> conservative, safe everywhere
        cap = 64 * 1024 * 1024
    return int(min(cap * 3 // 4, 100 * 1024 * 1024))


def _pick_batch_tile(B):
    # 256 fills the 2x256x256 MXU on v6e/v7x; 128 otherwise; tiny batches use
    # a single full-array tile (legal: block dim == full array dim).
    if B >= 256 and B % 256 == 0:
        return 256
    if B >= 128:
        return 128
    return B


def vae_forward(x_nchw, eps, packed):
    """x_nchw: (B, 3, H, W) f32.  eps: (B, L) f32 reparameterization noise.
    packed: output of pack_vae_params.  Returns (recon, mean, logvar, z)."""
    d_in = packed["d_in"]
    L = packed["latent"]
    chunk = packed["d_chunk"]
    d_pad, hid_pad = packed["enc_w"].shape
    l_pad = packed["dec1_w"].shape[0]
    B = x_nchw.shape[0]

    tb = _pick_batch_tile(B)
    B_pad = _round_up(B, tb)
    n_bt = B_pad // tb
    n_dc = d_pad // chunk

    # Flatten like torch `x.view(-1, 3*W*H)`, zero-pad lanes/batch, cast bf16
    # in the wrapper (halves x's HBM traffic; kernel truncated to bf16 anyway).
    x = x_nchw.reshape(B, d_in).astype(jnp.bfloat16)
    x = jnp.zeros((B_pad, d_pad), jnp.bfloat16).at[:B, :d_in].set(x)
    eps_pad = jnp.zeros((B_pad, l_pad), jnp.float32).at[:B, :L].set(eps)

    vmem_limit = _vmem_limit_bytes()

    # ---- kernel 1: encoder + head + reparameterize + decoder layer 1 ----
    h2, ms, z_pad = pl.pallas_call(
        _enc_kernel,
        out_shape=(
            jax.ShapeDtypeStruct((B_pad, hid_pad), jnp.bfloat16),     # h2
            jax.ShapeDtypeStruct((B_pad, 2 * l_pad), jnp.float32),    # mean|logvar
            jax.ShapeDtypeStruct((B_pad, l_pad), jnp.float32),        # z
        ),
        grid_spec=pltpu.PrefetchScalarGridSpec(
            num_scalar_prefetch=0,
            grid=(n_bt, n_dc),
            in_specs=[
                pl.BlockSpec((tb, chunk), lambda i, k: (i, k)),           # x
                pl.BlockSpec((tb, l_pad), lambda i, k: (i, 0)),           # eps
                pl.BlockSpec((chunk, hid_pad), lambda i, k: (k, 0)),      # enc_w
                pl.BlockSpec((1, hid_pad), lambda i, k: (0, 0)),          # enc_b
                pl.BlockSpec((hid_pad, 2 * l_pad), lambda i, k: (0, 0)),  # head_w
                pl.BlockSpec((1, 2 * l_pad), lambda i, k: (0, 0)),        # head_b
                pl.BlockSpec((l_pad, hid_pad), lambda i, k: (0, 0)),      # dec1_w
                pl.BlockSpec((1, hid_pad), lambda i, k: (0, 0)),          # dec1_b
            ],
            out_specs=[
                pl.BlockSpec((tb, hid_pad), lambda i, k: (i, 0)),
                pl.BlockSpec((tb, 2 * l_pad), lambda i, k: (i, 0)),
                pl.BlockSpec((tb, l_pad), lambda i, k: (i, 0)),
            ],
            scratch_shapes=[pltpu.VMEM((tb, hid_pad), jnp.float32)],
        ),
        compiler_params=pltpu.CompilerParams(
            dimension_semantics=("parallel", "arbitrary"),
            vmem_limit_bytes=vmem_limit,
        ),
    )(x, eps_pad, packed["enc_w"], packed["enc_b"], packed["head_w"],
      packed["head_b"], packed["dec1_w"], packed["dec1_b"])

    # ---- kernel 2: decoder layer 2 + sigmoid (N-chunked, lane-dense stores) ----
    # TODO(synk): emit recon as bf16 if the downstream loss tolerates it (halves
    # the largest HBM write); kept f32 here to match the module's semantics.
    recon = pl.pallas_call(
        _dec_kernel,
        out_shape=jax.ShapeDtypeStruct((B_pad, d_pad), jnp.float32),
        grid_spec=pltpu.PrefetchScalarGridSpec(
            num_scalar_prefetch=0,
            grid=(n_bt, n_dc),
            in_specs=[
                pl.BlockSpec((tb, hid_pad), lambda i, j: (i, 0)),     # h2
                pl.BlockSpec((hid_pad, chunk), lambda i, j: (0, j)),  # dec2_w
                pl.BlockSpec((1, chunk), lambda i, j: (0, j)),        # dec2_b
            ],
            out_specs=pl.BlockSpec((tb, chunk), lambda i, j: (i, j)),
        ),
        compiler_params=pltpu.CompilerParams(
            dimension_semantics=("parallel", "parallel"),
            vmem_limit_bytes=vmem_limit,
        ),
    )(h2, packed["dec2_w"], packed["dec2_b"])

    mean = ms[:B, :L]
    logvar = ms[:B, l_pad:l_pad + L]
    z = z_pad[:B, :L]
    return recon[:B, :d_in], mean, logvar, z


def init_vae_params(key, image_w, image_h, latent_size, hidden=400):
    """Deterministic init mimicking torch.nn.Linear defaults
    (uniform(-1/sqrt(fan_in), 1/sqrt(fan_in))).  Weights stored as (in, out)."""
    d_in = 3 * image_w * image_h

    def linear(key, fan_in, fan_out):
        kw, kb = jax.random.split(key)
        bound = 1.0 / math.sqrt(fan_in)
        w = jax.random.uniform(kw, (fan_in, fan_out), jnp.float32, -bound, bound)
        b = jax.random.uniform(kb, (1, fan_out), jnp.float32, -bound, bound)
        return w, b

    keys = jax.random.split(key, 5)
    enc_w, enc_b = linear(keys[0], d_in, hidden)
    mean_w, mean_b = linear(keys[1], hidden, latent_size)
    std_w, std_b = linear(keys[2], hidden, latent_size)
    dec1_w, dec1_b = linear(keys[3], latent_size, hidden)
    dec2_w, dec2_b = linear(keys[4], hidden, d_in)

    return dict(enc_w=enc_w, enc_b=enc_b, mean_w=mean_w, mean_b=mean_b,
                std_w=std_w, std_b=std_b, dec1_w=dec1_w, dec1_b=dec1_b,
                dec2_w=dec2_w, dec2_b=dec2_b)


def pack_vae_params(params, d_chunk=2048):
    """Pad d_in -> multiple of d_chunk (lane-aligned), hidden -> 512,
    latent -> 128; fuse mean|std heads; cast matmul weights to bf16.
    Zero padding is exact: padded hidden units come out as ReLU(0)=0, padded
    latent dims get mean=logvar=0 with eps=0 -> z=0, padded d_in columns of x
    multiply zero enc_w rows, so nothing leaks into the real outputs."""
    assert d_chunk % 128 == 0
    d_in, hidden = params["enc_w"].shape
    latent = params["mean_w"].shape[1]

    d_chunk = min(d_chunk, _round_up(d_in, 128))   # don't over-pad tiny images
    d_pad = _round_up(d_in, d_chunk)
    hid_pad = _round_up(hidden, 128)
    lat_pad = _round_up(max(latent, 128), 128)

    def pad2(a, rows, cols):
        out = jnp.zeros((rows, cols), a.dtype)
        return out.at[:a.shape[0], :a.shape[1]].set(a)

    head_w = jnp.concatenate(
        [pad2(params["mean_w"], hid_pad, lat_pad),
         pad2(params["std_w"], hid_pad, lat_pad)], axis=1)
    head_b = jnp.concatenate(
        [pad2(params["mean_b"], 1, lat_pad),
         pad2(params["std_b"], 1, lat_pad)], axis=1)

    return dict(
        d_in=d_in, d_chunk=d_chunk, latent=latent,
        enc_w=pad2(params["enc_w"], d_pad, hid_pad).astype(jnp.bfloat16),
        enc_b=pad2(params["enc_b"], 1, hid_pad),
        head_w=head_w.astype(jnp.bfloat16),
        head_b=head_b,
        dec1_w=pad2(params["dec1_w"], lat_pad, hid_pad).astype(jnp.bfloat16),
        dec1_b=pad2(params["dec1_b"], 1, hid_pad),
        dec2_w=pad2(params["dec2_w"], hid_pad, d_pad).astype(jnp.bfloat16),
        dec2_b=pad2(params["dec2_b"], 1, d_pad),
    )


def vae_reference(x_nchw, eps, packed):
    """Pure-JAX reference using the same packed bf16 weights, so the comparison
    only absorbs accumulation-order differences (not quantization error)."""
    d_in, L = packed["d_in"], packed["latent"]
    d_pad, hid_pad = packed["enc_w"].shape
    l_pad = packed["dec1_w"].shape[0]
    B = x_nchw.shape[0]
    f32, bf16 = jnp.float32, jnp.bfloat16

    x = jnp.zeros((B, d_pad), bf16).at[:, :d_in].set(
        x_nchw.reshape(B, d_in).astype(bf16))
    eps_pad = jnp.zeros((B, l_pad), f32).at[:, :L].set(eps)

    h1 = jnp.maximum(
        jnp.dot(x, packed["enc_w"], preferred_element_type=f32)
        + packed["enc_b"], 0.0)
    ms = jnp.dot(h1.astype(bf16), packed["head_w"],
                 preferred_element_type=f32) + packed["head_b"]
    mean, logvar = ms[:, :l_pad], ms[:, l_pad:]
    z = mean + eps_pad * jnp.exp(0.5 * logvar)
    h2 = jnp.maximum(
        jnp.dot(z.astype(bf16), packed["dec1_w"], preferred_element_type=f32)
        + packed["dec1_b"], 0.0)
    logits = jnp.dot(h2.astype(bf16), packed["dec2_w"],
                     preferred_element_type=f32) + packed["dec2_b"]
    recon = jax.nn.sigmoid(logits)
    return recon[:, :d_in], mean[:, :L], logvar[:, :L], z[:, :L]


if __name__ == "__main__":
    # Small shapes consistent with the module: 3-channel 16x16 images, latent 32.
    B, IMAGE_W, IMAGE_H, LATENT = 2, 16, 16, 32

    key = jax.random.PRNGKey(0)
    k_params, k_x, k_eps = jax.random.split(key, 3)

    params = init_vae_params(k_params, IMAGE_W, IMAGE_H, LATENT)
    # Small d_chunk so the demo actually exercises the K/N streaming path
    # (d_in = 768 -> 3 chunks of 256); real 200x200 images use the 2048 default.
    packed = pack_vae_params(params, d_chunk=256)

    x = jax.random.normal(k_x, (B, 3, IMAGE_H, IMAGE_W), jnp.float32)
    # eps ~ N(0,1): stand-in for torch.randn_like in reparameterize
    eps = jax.random.normal(k_eps, (B, LATENT), jnp.float32)

    recon, mean, logvar, z = vae_forward(x, eps, packed)
    jax.block_until_ready((recon, mean, logvar, z))

    r_ref, m_ref, lv_ref, z_ref = vae_reference(x, eps, packed)
    assert jnp.allclose(recon, r_ref, atol=5e-3, rtol=5e-3), "recon mismatch"
    assert jnp.allclose(mean, m_ref, atol=5e-3, rtol=5e-3), "mean mismatch"
    assert jnp.allclose(logvar, lv_ref, atol=5e-3, rtol=5e-3), "logvar mismatch"
    assert jnp.allclose(z, z_ref, atol=5e-3, rtol=5e-3), "z mismatch"

    print("KERNEL_OK")
</pallas_src>

<mosaic_0001>
module attributes {stable_mosaic.version = 11 : i64} {
  func.func @_enc_kernel(%arg0: i32, %arg1: i32, %arg2: memref<2x256xbf16, #tpu.memory_space<vmem>>, %arg3: memref<2x128xf32, #tpu.memory_space<vmem>>, %arg4: memref<256x512xbf16, #tpu.memory_space<vmem>>, %arg5: memref<1x512xf32, #tpu.memory_space<vmem>>, %arg6: memref<512x256xbf16, #tpu.memory_space<vmem>>, %arg7: memref<1x256xf32, #tpu.memory_space<vmem>>, %arg8: memref<128x512xbf16, #tpu.memory_space<vmem>>, %arg9: memref<1x512xf32, #tpu.memory_space<vmem>>, %arg10: memref<2x512xbf16, #tpu.memory_space<vmem>>, %arg11: memref<2x256xf32, #tpu.memory_space<vmem>>, %arg12: memref<2x128xf32, #tpu.memory_space<vmem>>, %arg13: memref<2x512xf32, #tpu.memory_space<vmem>>) attributes {dimension_semantics = [#tpu.dimension_semantics<parallel>, #tpu.dimension_semantics<arbitrary>], iteration_bounds = array<i64: 1, 3>, scalar_prefetch = 0 : i64, scratch_operands = 1 : i64, tpu.core_type = #tpu.core_type<tc>, window_params = [{transform_indices = @transform_0, window_bounds = array<i64: 2, 256>}, {transform_indices = @transform_1, window_bounds = array<i64: 2, 128>}, {transform_indices = @transform_2, window_bounds = array<i64: 256, 512>}, {pipeline_mode = #tpu.pipeline_mode<synchronous>, transform_indices = @transform_3, window_bounds = array<i64: 1, 512>}, {pipeline_mode = #tpu.pipeline_mode<synchronous>, transform_indices = @transform_4, window_bounds = array<i64: 512, 256>}, {pipeline_mode = #tpu.pipeline_mode<synchronous>, transform_indices = @transform_5, window_bounds = array<i64: 1, 256>}, {pipeline_mode = #tpu.pipeline_mode<synchronous>, transform_indices = @transform_6, window_bounds = array<i64: 128, 512>}, {pipeline_mode = #tpu.pipeline_mode<synchronous>, transform_indices = @transform_7, window_bounds = array<i64: 1, 512>}, {transform_indices = @transform_8, window_bounds = array<i64: 2, 512>}, {transform_indices = @transform_9, window_bounds = array<i64: 2, 256>}, {transform_indices = @transform_10, window_bounds = array<i64: 2, 128>}]} {
    %c0_i32 = arith.constant 0 : i32
    %0 = arith.cmpi eq, %arg1, %c0_i32 : i32
    %1 = arith.extui %0 : i1 to i32
    %c0_i32_0 = arith.constant 0 : i32
    %2 = arith.cmpi ne, %1, %c0_i32_0 : i32
    scf.if %2 {
      %cst_9 = arith.constant 0.000000e+00 : f32
      %12 = vector.broadcast %cst_9 : f32 to vector<2x512xf32>
      %c0_10 = arith.constant 0 : index
      %c0_11 = arith.constant 0 : index
      %13 = vector.load %arg13[%c0_10, %c0_11] : memref<2x512xf32, #tpu.memory_space<vmem>>, vector<2x512xf32>
      tpu.vector_store %arg13[%c0_10, %c0_11], %12 {strides = array<i32>} : memref<2x512xf32, #tpu.memory_space<vmem>>, vector<2x512xf32>,
    } else {
    }
    %c0 = arith.constant 0 : index
    %c0_1 = arith.constant 0 : index
    %3 = vector.load %arg13[%c0, %c0_1] : memref<2x512xf32, #tpu.memory_space<vmem>>, vector<2x512xf32>
    %c0_2 = arith.constant 0 : index
    %c0_3 = arith.constant 0 : index
    %4 = vector.load %arg2[%c0_2, %c0_3] : memref<2x256xbf16, #tpu.memory_space<vmem>>, vector<2x256xbf16>
    %c0_4 = arith.constant 0 : index
    %c0_5 = arith.constant 0 : index
    %5 = vector.load %arg4[%c0_4, %c0_5] : memref<256x512xbf16, #tpu.memory_space<vmem>>, vector<256x512xbf16>
    %cst = arith.constant dense<0.000000e+00> : vector<2x512xf32>
    %6 = tpu.matmul %4, %5, %cst {dimension_numbers = #tpu.dot_dimension_numbers<[1], [0], [0], [1], [0, 0, 1, 1], [], []>} : vector<2x256xbf16>, vector<256x512xbf16>, vector<2x512xf32> -> vector<2x512xf32>
    %7 = arith.addf %3, %6 : vector<2x512xf32>
    %c0_6 = arith.constant 0 : index
    %c0_7 = arith.constant 0 : index
    %8 = vector.load %arg13[%c0_6, %c0_7] : memref<2x512xf32, #tpu.memory_space<vmem>>, vector<2x512xf32>
    tpu.vector_store %arg13[%c0_6, %c0_7], %7 {strides = array<i32>} : memref<2x512xf32, #tpu.memory_space<vmem>>, vector<2x512xf32>,
    %c2_i32 = arith.constant 2 : i32
    %9 = arith.cmpi eq, %arg1, %c2_i32 : i32
    %10 = arith.extui %9 : i1 to i32
    %c0_i32_8 = arith.constant 0 : i32
    %11 = arith.cmpi ne, %10, %c0_i32_8 : i32
    scf.if %11 {
      %c0_9 = arith.constant 0 : index
      %c0_10 = arith.constant 0 : index
      %12 = vector.load %arg13[%c0_9, %c0_10] : memref<2x512xf32, #tpu.memory_space<vmem>>, vector<2x512xf32>
      %c0_11 = arith.constant 0 : index
      %c0_12 = arith.constant 0 : index
      %13 = vector.load %arg5[%c0_11, %c0_12] : memref<1x512xf32, #tpu.memory_space<vmem>>, vector<1x512xf32>
      %14 = vector.broadcast %13 : vector<1x512xf32> to vector<2x512xf32>
      %15 = arith.addf %12, %14 : vector<2x512xf32>
      %cst_13 = arith.constant 0.000000e+00 : f32
      %16 = vector.broadcast %cst_13 : f32 to vector<2x512xf32>
      %17 = arith.maximumf %15, %16 : vector<2x512xf32>
      %18 = arith.truncf %17 : vector<2x512xf32> to vector<2x512xbf16>
      %c0_14 = arith.constant 0 : index
      %c0_15 = arith.constant 0 : index
      %19 = vector.load %arg6[%c0_14, %c0_15] : memref<512x256xbf16, #tpu.memory_space<vmem>>, vector<512x256xbf16>
      %cst_16 = arith.constant dense<0.000000e+00> : vector<2x256xf32>
      %20 = tpu.matmul %18, %19, %cst_16 {dimension_numbers = #tpu.dot_dimension_numbers<[1], [0], [0], [1], [0, 0, 1, 1], [], []>} : vector<2x512xbf16>, vector<512x256xbf16>, vector<2x256xf32> -> vector<2x256xf32>
      %c0_17 = arith.constant 0 : index
      %c0_18 = arith.constant 0 : index
      %21 = vector.load %arg7[%c0_17, %c0_18] : memref<1x256xf32, #tpu.memory_space<vmem>>, vector<1x256xf32>
      %22 = vector.broadcast %21 : vector<1x256xf32> to vector<2x256xf32>
      %23 = arith.addf %20, %22 : vector<2x256xf32>
      %24 = vector.extract_strided_slice %23 {offsets = [0, 0], sizes = [2, 128], strides = [1, 1]} : vector<2x256xf32> to vector<2x128xf32>
      %25 = vector.extract_strided_slice %23 {offsets = [0, 128], sizes = [2, 128], strides = [1, 1]} : vector<2x256xf32> to vector<2x128xf32>
      %c0_19 = arith.constant 0 : index
      %c0_20 = arith.constant 0 : index
      %26 = vector.load %arg3[%c0_19, %c0_20] : memref<2x128xf32, #tpu.memory_space<vmem>>, vector<2x128xf32>
      %cst_21 = arith.constant 5.000000e-01 : f32
      %27 = vector.broadcast %cst_21 : f32 to vector<2x128xf32>
      %28 = arith.mulf %27, %25 : vector<2x128xf32>
      %29 = math.exp %28 : vector<2x128xf32>
      %30 = arith.mulf %26, %29 : vector<2x128xf32>
      %31 = arith.addf %24, %30 : vector<2x128xf32>
      %32 = arith.truncf %31 : vector<2x128xf32> to vector<2x128xbf16>
      %c0_22 = arith.constant 0 : index
      %c0_23 = arith.constant 0 : index
      %33 = vector.load %arg8[%c0_22, %c0_23] : memref<128x512xbf16, #tpu.memory_space<vmem>>, vector<128x512xbf16>
      %cst_24 = arith.constant dense<0.000000e+00> : vector<2x512xf32>
      %34 = tpu.matmul %32, %33, %cst_24 {dimension_numbers = #tpu.dot_dimension_numbers<[1], [0], [0], [1], [0, 0, 1, 1], [], []>} : vector<2x128xbf16>, vector<128x512xbf16>, vector<2x512xf32> -> vector<2x512xf32>
      %c0_25 = arith.constant 0 : index
      %c0_26 = arith.constant 0 : index
      %35 = vector.load %arg9[%c0_25, %c0_26] : memref<1x512xf32, #tpu.memory_space<vmem>>, vector<1x512xf32>
      %36 = vector.broadcast %35 : vector<1x512xf32> to vector<2x512xf32>
      %37 = arith.addf %34, %36 : vector<2x512xf32>
      %cst_27 = arith.constant 0.000000e+00 : f32
      %38 = vector.broadcast %cst_27 : f32 to vector<2x512xf32>
      %39 = arith.maximumf %37, %38 : vector<2x512xf32>
      %40 = arith.truncf %39 : vector<2x512xf32> to vector<2x512xbf16>
      %c0_28 = arith.constant 0 : index
      %c0_29 = arith.constant 0 : index
      %41 = vector.load %arg10[%c0_28, %c0_29] : memref<2x512xbf16, #tpu.memory_space<vmem>>, vector<2x512xbf16>
      tpu.vector_store %arg10[%c0_28, %c0_29], %40 {strides = array<i32>} : memref<2x512xbf16, #tpu.memory_space<vmem>>, vector<2x512xbf16>,
      %c0_30 = arith.constant 0 : index
      %c0_31 = arith.constant 0 : index
      %42 = vector.load %arg11[%c0_30, %c0_31] : memref<2x256xf32, #tpu.memory_space<vmem>>, vector<2x256xf32>
      tpu.vector_store %arg11[%c0_30, %c0_31], %23 {strides = array<i32>} : memref<2x256xf32, #tpu.memory_space<vmem>>, vector<2x256xf32>,
      %c0_32 = arith.constant 0 : index
      %c0_33 = arith.constant 0 : index
      %43 = vector.load %arg12[%c0_32, %c0_33] : memref<2x128xf32, #tpu.memory_space<vmem>>, vector<2x128xf32>
      tpu.vector_store %arg12[%c0_32, %c0_33], %31 {strides = array<i32>} : memref<2x128xf32, #tpu.memory_space<vmem>>, vector<2x128xf32>,
    } else {
    }
    return
  }
  func.func @transform_0(%arg0: i32, %arg1: i32) -> (i32, i32) {
    %c0_i32 = arith.constant 0 : i32
    return %arg0, %arg1 : i32, i32
  }
  func.func @transform_1(%arg0: i32, %arg1: i32) -> (i32, i32) {
    %c0_i32 = arith.constant 0 : i32
    %c0_i32_0 = arith.constant 0 : i32
    return %arg0, %c0_i32 : i32, i32
  }
  func.func @transform_2(%arg0: i32, %arg1: i32) -> (i32, i32) {
    %c0_i32 = arith.constant 0 : i32
    %c0_i32_0 = arith.constant 0 : i32
    return %arg1, %c0_i32 : i32, i32
  }
  func.func @transform_3(%arg0: i32, %arg1: i32) -> (i32, i32) {
    %c0_i32 = arith.constant 0 : i32
    %c0_i32_0 = arith.constant 0 : i32
    %c0_i32_1 = arith.constant 0 : i32
    return %c0_i32, %c0_i32_0 : i32, i32
  }
  func.func @transform_4(%arg0: i32, %arg1: i32) -> (i32, i32) {
    %c0_i32 = arith.constant 0 : i32
    %c0_i32_0 = arith.constant 0 : i32
    %c0_i32_1 = arith.constant 0 : i32
    return %c0_i32, %c0_i32_0 : i32, i32
  }
  func.func @transform_5(%arg0: i32, %arg1: i32) -> (i32, i32) {
    %c0_i32 = arith.constant 0 : i32
    %c0_i32_0 = arith.constant 0 : i32
    %c0_i32_1 = arith.constant 0 : i32
    return %c0_i32, %c0_i32_0 : i32, i32
  }
  func.func @transform_6(%arg0: i32, %arg1: i32) -> (i32, i32) {
    %c0_i32 = arith.constant 0 : i32
    %c0_i32_0 = arith.constant 0 : i32
    %c0_i32_1 = arith.constant 0 : i32
    return %c0_i32, %c0_i32_0 : i32, i32
  }
  func.func @transform_7(%arg0: i32, %arg1: i32) -> (i32, i32) {
    %c0_i32 = arith.constant 0 : i32
    %c0_i32_0 = arith.constant 0 : i32
    %c0_i32_1 = arith.constant 0 : i32
    return %c0_i32, %c0_i32_0 : i32, i32
  }
  func.func @transform_8(%arg0: i32, %arg1: i32) -> (i32, i32) {
    %c0_i32 = arith.constant 0 : i32
    %c0_i32_0 = arith.constant 0 : i32
    return %arg0, %c0_i32 : i32, i32
  }
  func.func @transform_9(%arg0: i32, %arg1: i32) -> (i32, i32) {
    %c0_i32 = arith.constant 0 : i32
    %c0_i32_0 = arith.constant 0 : i32
    return %arg0, %c0_i32 : i32, i32
  }
  func.func @transform_10(%arg0: i32, %arg1: i32) -> (i32, i32) {
    %c0_i32 = arith.constant 0 : i32
    %c0_i32_0 = arith.constant 0 : i32
    return %arg0, %c0_i32 : i32, i32
  }
}

</mosaic_0001>

<llo_original>
// kernel: tpu_custom_call.1
$region0: #{tpu_custom_call.1}
  #allocation0 [shape = 'u32[]', space=smem, size = 0x4, offset = 0x4, fixed_abs, tag = 'smem constant byte address 0x4 - core index']
  #allocation1 [shape = 'u32[144,128]{1,0:T(1,128)}', space=vmem, size = 0x12000, scoped, tag = 'internal scratch']
  #allocation2 [shape = 'f32[2,512]{1,0:T(2,128)}', space=vmem, size = 0x1000, scoped, tag = 'scratch operand']
  %s0 = inlined_call_operand.hbm [shape: bf16[2,768], index: 0, kind: input, shape index: {}]
  %s1 = inlined_call_operand.vmem [shape: f32[2,128], index: 1, kind: input, shape index: {}]
  %s2 = inlined_call_operand.hbm [shape: bf16[768,512], index: 2, kind: input, shape index: {}]
  %s3 = inlined_call_operand.vmem [shape: f32[1,512], index: 3, kind: input, shape index: {}]
  %s4 = inlined_call_operand.hbm [shape: bf16[512,256], index: 4, kind: input, shape index: {}]
  %s5 = inlined_call_operand.vmem [shape: f32[1,256], index: 5, kind: input, shape index: {}]
  %s6 = inlined_call_operand.hbm [shape: bf16[128,512], index: 6, kind: input, shape index: {}]
  %s7 = inlined_call_operand.vmem [shape: f32[1,512], index: 7, kind: input, shape index: {}]
  %s8 = inlined_call_operand.hbm [shape: bf16[2,512], index: 8, kind: output, shape index: {0}]
  %s9 = inlined_call_operand.hbm [shape: f32[2,256], index: 9, kind: output, shape index: {1}]
  %s10 = inlined_call_operand.hbm [shape: f32[2,128], index: 10, kind: output, shape index: {2}]
  %11 = xla_tuple %s8, %s9, %s10
  %s12 = sld [smem:[#allocation0]]
  $region105: #{tpu_custom_call.1} parent=0
    _
  %s14 = ssub.s32 1, %s12
  %s15 = scalar_select 0, %s14, %s12
  $region1: #{tpu_custom_call.1} parent=0
    #allocation3 [shape = 'u8[2048]{0}', space=vmem, size = 0x800, scoped, tag = 'input window, operand 0']
    #allocation4 [shape = 's32[2]{0}', space=sflag, size = 0x8, scoped, tag = 'scoped memory for tpu_custom_call.1']
    #allocation5 [shape = 's32[2]{0}', space=sflag, size = 0x8, scoped, tag = 'scoped memory for tpu_custom_call.1']
    #allocation6 [shape = 'u8[524288]{0}', space=vmem, size = 0x80000, scoped, tag = 'input window, operand 2']
    #allocation7 [shape = 's32[2]{0}', space=sflag, size = 0x8, scoped, tag = 'scoped memory for tpu_custom_call.1']
    #allocation8 [shape = 'u8[262144]{0}', space=vmem, size = 0x40000, scoped, tag = 'input window, operand 4, single buffered']
    #allocation9 [shape = 'u8[131072]{0}', space=vmem, size = 0x20000, scoped, tag = 'input window, operand 6, single buffered']
    #allocation10 [shape = 's32[1]{0}', space=sflag, size = 0x4, scoped, tag = 'scoped memory for tpu_custom_call.1']
    #allocation11 [shape = 'u8[2048]{0}', space=vmem, size = 0x800, scoped, tag = 'output window, operand 0, single buffered']
    #allocation12 [shape = 'u8[2048]{0}', space=vmem, size = 0x800, scoped, tag = 'output window, operand 1, single buffered']
    #allocation13 [shape = 's32[1]{0}', space=sflag, size = 0x4, scoped, tag = 'scoped memory for tpu_custom_call.1']
    #allocation14 [shape = 'u8[1024]{0}', space=vmem, size = 0x400, scoped, tag = 'output window, operand 2, single buffered']
    %16 = vsyncpa [#allocation4], 0
    %s17 = scalar_lea.sflag [#allocation4], 1
    %18 = vsyncpa %s17, 0
    %19 = vsyncpa [#allocation7], 0
    %s20 = scalar_lea.sflag [#allocation7], 1
    %21 = vsyncpa %s20, 0
    %22 = vsyncpa [#allocation10], 0
    %23 = vsyncpa [#allocation5], 0
    %24 = vsyncpa [#allocation13], 0
    loop: start=0, step=1, limit=5
    $region2: #{tpu_custom_call.1} parent=1 // loop_pre_header
      _
    $region3: #{tpu_custom_call.1} parent=1 // loop_header
      %s26 = sphi 0, %s30
      %p27 = scmp.ge.s32.totalorder %s26, 5
      %s33 = sphi 0, %s45
      %s34 = sphi 0, %s41
      %s35 = sphi 0, %s33
      %s36 = sphi 0, %s34
      %s37 = sphi 0, %s35
      %s38 = sphi 0, %s36
      %s50 = sphi 0, %s52
      %s53 = sphi 0, %s50
      %s54 = sphi 0, %s53
      %s70 = sphi 0, %s54
      %s76 = sphi 0, %s78
      %s79 = sphi 0, %s76
      %s80 = sphi 0, %s79
      %s96 = sphi 0, %s80
      %s102 = sphi 0, %s104
      %s105 = sphi 0, %s102
      %s106 = sphi 0, %s105
      %s122 = sphi 0, %s106
      %s126 = sphi 0, %s126
      %s128 = sphi 0, %s126
      %s129 = sphi 0, %s128
      %s143 = sphi 0, %s129
      %s147 = sphi 0, %s147
      %s149 = sphi 0, %s147
      %s150 = sphi 0, %s149
      %s164 = sphi 0, %s150
      %s168 = sphi 0, %s168
      %s170 = sphi 0, %s168
      %s171 = sphi 0, %s170
      %s185 = sphi 0, %s171
      %s189 = sphi 0, %s189
      %s191 = sphi 0, %s189
      %s192 = sphi 0, %s191
      %s206 = sphi 0, %s192
      %s210 = sphi 0, %s210
      %s212 = sphi 0, %s210
      %s213 = sphi 0, %s212
      %s227 = sphi 0, %s213
      %s233 = sphi 0, %s235
      %s236 = sphi 0, %s233
      %s237 = sphi 0, %s236
      %s253 = sphi 0, %s237
      %s259 = sphi 0, %s261
      %s262 = sphi 0, %s259
      %s263 = sphi 0, %s262
      %s279 = sphi 0, %s263
      %s285 = sphi 0, %s287
      %s288 = sphi 0, %s285
      %s289 = sphi 0, %s288
      %s305 = sphi 0, %s289
    $region4: #{tpu_custom_call.1} parent=1 // loop_header_branch
      %29 = sbr.rel (%p27) target = $region8
    $region5: #{tpu_custom_call.1} parent=1 // loop_body
      %s31 = ssub.s32 %s26, 1
      %s32 = ssub.s32 %s26, 2
      %s39 = sadd.s32 1, %s34
      %p40 = scmp.ge.s32.totalorder %s39, 3
      %s41 = scalar_select %p40, 0, %s39
      %s42 = sadd.s32 1, %s33
      %s43 = scalar_select %p40, %s42, %s33
      %p44 = scmp.ge.s32.totalorder %s43, 1
      %s45 = scalar_select %p44, 0, %s43
      %s46 = ssub.s32 %s33, %s45
      %s47 = ssub.s32 %s34, %s41
      %s48 = sor.u32 %s46, %s47
      %p49 = scmp.eq.s32.totalorder %s48, 0
      %s51 = sadd.s32 %s50, 1
      %s52 = scalar_select %p49, %s50, %s51
      %p55 = pneg %p49
      %p56 = scmp.eq.s32.totalorder %s26, 2
      %p57 = por %p55, %p56
      %p58 = scmp.ne.s32.totalorder %s50, %s53
      %p59 = scmp.eq.s32.totalorder %s26, 0
      %p60 = por %p58, %p59
      %p61 = scmp.ne.s32.totalorder %s50, %s53
      %p62 = scmp.eq.s32.totalorder %s31, 2
      %p63 = por %p61, %p62
      %p64 = scmp.ne.s32.totalorder %s53, %s54
      %p65 = scmp.eq.s32.totalorder %s31, 0
      %p66 = por %p64, %p65
      %p67 = scmp.ne.s32.totalorder %s53, %s54
      %p68 = scmp.eq.s32.totalorder %s32, 2
      %p69 = por %p67, %p68
      %p71 = scmp.ne.s32.totalorder %s54, %s70
      %p72 = scmp.eq.s32.totalorder %s32, 0
      %p73 = por %p71, %p72
      %s74 = ssub.s32 %s33, %s45
      %p75 = scmp.eq.s32.totalorder %s74, 0
      %s77 = sadd.s32 %s76, 1
      %s78 = scalar_select %p75, %s76, %s77
      %p81 = pneg %p75
      %p82 = scmp.eq.s32.totalorder %s26, 2
      %p83 = por %p81, %p82
      %p84 = scmp.ne.s32.totalorder %s76, %s79
      %p85 = scmp.eq.s32.totalorder %s26, 0
      %p86 = por %p84, %p85
      %p87 = scmp.ne.s32.totalorder %s76, %s79
      %p88 = scmp.eq.s32.totalorder %s31, 2
      %p89 = por %p87, %p88
      %p90 = scmp.ne.s32.totalorder %s79, %s80
      %p91 = scmp.eq.s32.totalorder %s31, 0
      %p92 = por %p90, %p91
      %p93 = scmp.ne.s32.totalorder %s79, %s80
      %p94 = scmp.eq.s32.totalorder %s32, 2
      %p95 = por %p93, %p94
      %p97 = scmp.ne.s32.totalorder %s80, %s96
      %p98 = scmp.eq.s32.totalorder %s32, 0
      %p99 = por %p97, %p98
      %s100 = ssub.s32 %s34, %s41
      %p101 = scmp.eq.s32.totalorder %s100, 0
      %s103 = sadd.s32 %s102, 1
      %s104 = scalar_select %p101, %s102, %s103
      %p107 = pneg %p101
      %p108 = scmp.eq.s32.totalorder %s26, 2
      %p109 = por %p107, %p108
      %p110 = scmp.ne.s32.totalorder %s102, %s105
      %p111 = scmp.eq.s32.totalorder %s26, 0
      %p112 = por %p110, %p111
      %p113 = scmp.ne.s32.totalorder %s102, %s105
      %p114 = scmp.eq.s32.totalorder %s31, 2
      %p115 = por %p113, %p114
      %p116 = scmp.ne.s32.totalorder %s105, %s106
      %p117 = scmp.eq.s32.totalorder %s31, 0
      %p118 = por %p116, %p117
      %p119 = scmp.ne.s32.totalorder %s105, %s106
      %p120 = scmp.eq.s32.totalorder %s32, 2
      %p121 = por %p119, %p120
      %p123 = scmp.ne.s32.totalorder %s106, %s122
      %p124 = scmp.eq.s32.totalorder %s32, 0
      %p125 = por %p123, %p124
      %s127 = sadd.s32 %s126, 1
      %p130 = scmp.eq.s32.totalorder %s26, 2
      %p131 = scmp.ne.s32.totalorder %s126, %s128
      %p132 = scmp.eq.s32.totalorder %s26, 0
      %p133 = por %p131, %p132
      %p134 = scmp.ne.s32.totalorder %s126, %s128
      %p135 = scmp.eq.s32.totalorder %s31, 2
      %p136 = por %p134, %p135
      %p137 = scmp.ne.s32.totalorder %s128, %s129
      %p138 = scmp.eq.s32.totalorder %s31, 0
      %p139 = por %p137, %p138
      %p140 = scmp.ne.s32.totalorder %s128, %s129
      %p141 = scmp.eq.s32.totalorder %s32, 2
      %p142 = por %p140, %p141
      %p144 = scmp.ne.s32.totalorder %s129, %s143
      %p145 = scmp.eq.s32.totalorder %s32, 0
      %p146 = por %p144, %p145
      %s148 = sadd.s32 %s147, 1
      %p151 = scmp.eq.s32.totalorder %s26, 2
      %p152 = scmp.ne.s32.totalorder %s147, %s149
      %p153 = scmp.eq.s32.totalorder %s26, 0
      %p154 = por %p152, %p153
      %p155 = scmp.ne.s32.totalorder %s147, %s149
      %p156 = scmp.eq.s32.totalorder %s31, 2
      %p157 = por %p155, %p156
      %p158 = scmp.ne.s32.totalorder %s149, %s150
      %p159 = scmp.eq.s32.totalorder %s31, 0
      %p160 = por %p158, %p159
      %p161 = scmp.ne.s32.totalorder %s149, %s150
      %p162 = scmp.eq.s32.totalorder %s32, 2
      %p163 = por %p161, %p162
      %p165 = scmp.ne.s32.totalorder %s150, %s164
      %p166 = scmp.eq.s32.totalorder %s32, 0
      %p167 = por %p165, %p166
      %s169 = sadd.s32 %s168, 1
      %p172 = scmp.eq.s32.totalorder %s26, 2
      %p173 = scmp.ne.s32.totalorder %s168, %s170
      %p174 = scmp.eq.s32.totalorder %s26, 0
      %p175 = por %p173, %p174
      %p176 = scmp.ne.s32.totalorder %s168, %s170
      %p177 = scmp.eq.s32.totalorder %s31, 2
      %p178 = por %p176, %p177
      %p179 = scmp.ne.s32.totalorder %s170, %s171
      %p180 = scmp.eq.s32.totalorder %s31, 0
      %p181 = por %p179, %p180
      %p182 = scmp.ne.s32.totalorder %s170, %s171
      %p183 = scmp.eq.s32.totalorder %s32, 2
      %p184 = por %p182, %p183
      %p186 = scmp.ne.s32.totalorder %s171, %s185
      %p187 = scmp.eq.s32.totalorder %s32, 0
      %p188 = por %p186, %p187
      %s190 = sadd.s32 %s189, 1
      %p193 = scmp.eq.s32.totalorder %s26, 2
      %p194 = scmp.ne.s32.totalorder %s189, %s191
      %p195 = scmp.eq.s32.totalorder %s26, 0
      %p196 = por %p194, %p195
      %p197 = scmp.ne.s32.totalorder %s189, %s191
      %p198 = scmp.eq.s32.totalorder %s31, 2
      %p199 = por %p197, %p198
      %p200 = scmp.ne.s32.totalorder %s191, %s192
      %p201 = scmp.eq.s32.totalorder %s31, 0
      %p202 = por %p200, %p201
      %p203 = scmp.ne.s32.totalorder %s191, %s192
      %p204 = scmp.eq.s32.totalorder %s32, 2
      %p205 = por %p203, %p204
      %p207 = scmp.ne.s32.totalorder %s192, %s206
      %p208 = scmp.eq.s32.totalorder %s32, 0
      %p209 = por %p207, %p208
      %s211 = sadd.s32 %s210, 1
      %p214 = scmp.eq.s32.totalorder %s26, 2
      %p215 = scmp.ne.s32.totalorder %s210, %s212
      %p216 = scmp.eq.s32.totalorder %s26, 0
      %p217 = por %p215, %p216
      %p218 = scmp.ne.s32.totalorder %s210, %s212
      %p219 = scmp.eq.s32.totalorder %s31, 2
      %p220 = por %p218, %p219
      %p221 = scmp.ne.s32.totalorder %s212, %s213
      %p222 = scmp.eq.s32.totalorder %s31, 0
      %p223 = por %p221, %p222
      %p224 = scmp.ne.s32.totalorder %s212, %s213
      %p225 = scmp.eq.s32.totalorder %s32, 2
      %p226 = por %p224, %p225
      %p228 = scmp.ne.s32.totalorder %s213, %s227
      %p229 = scmp.eq.s32.totalorder %s32, 0
      %p230 = por %p228, %p229
      %s231 = ssub.s32 %s33, %s45
      %p232 = scmp.eq.s32.totalorder %s231, 0
      %s234 = sadd.s32 %s233, 1
      %s235 = scalar_select %p232, %s233, %s234
      %p238 = pneg %p232
      %p239 = scmp.eq.s32.totalorder %s26, 2
      %p240 = por %p238, %p239
      %p241 = scmp.ne.s32.totalorder %s233, %s236
      %p242 = scmp.eq.s32.totalorder %s26, 0
      %p243 = por %p241, %p242
      %p244 = scmp.ne.s32.totalorder %s233, %s236
      %p245 = scmp.eq.s32.totalorder %s31, 2
      %p246 = por %p244, %p245
      %p247 = scmp.ne.s32.totalorder %s236, %s237
      %p248 = scmp.eq.s32.totalorder %s31, 0
      %p249 = por %p247, %p248
      %p250 = scmp.ne.s32.totalorder %s236, %s237
      %p251 = scmp.eq.s32.totalorder %s32, 2
      %p252 = por %p250, %p251
      %p254 = scmp.ne.s32.totalorder %s237, %s253
      %p255 = scmp.eq.s32.totalorder %s32, 0
      %p256 = por %p254, %p255
      %s257 = ssub.s32 %s33, %s45
      %p258 = scmp.eq.s32.totalorder %s257, 0
      %s260 = sadd.s32 %s259, 1
      %s261 = scalar_select %p258, %s259, %s260
      %p264 = pneg %p258
      %p265 = scmp.eq.s32.totalorder %s26, 2
      %p266 = por %p264, %p265
      %p267 = scmp.ne.s32.totalorder %s259, %s262
      %p268 = scmp.eq.s32.totalorder %s26, 0
      %p269 = por %p267, %p268
      %p270 = scmp.ne.s32.totalorder %s259, %s262
      %p271 = scmp.eq.s32.totalorder %s31, 2
      %p272 = por %p270, %p271
      %p273 = scmp.ne.s32.totalorder %s262, %s263
      %p274 = scmp.eq.s32.totalorder %s31, 0
      %p275 = por %p273, %p274
      %p276 = scmp.ne.s32.totalorder %s262, %s263
      %p277 = scmp.eq.s32.totalorder %s32, 2
      %p278 = por %p276, %p277
      %p280 = scmp.ne.s32.totalorder %s263, %s279
      %p281 = scmp.eq.s32.totalorder %s32, 0
      %p282 = por %p280, %p281
      %s283 = ssub.s32 %s33, %s45
      %p284 = scmp.eq.s32.totalorder %s283, 0
      %s286 = sadd.s32 %s285, 1
      %s287 = scalar_select %p284, %s285, %s286
      %p290 = pneg %p284
      %p291 = scmp.eq.s32.totalorder %s26, 2
      %p292 = por %p290, %p291
      %p293 = scmp.ne.s32.totalorder %s285, %s288
      %p294 = scmp.eq.s32.totalorder %s26, 0
      %p295 = por %p293, %p294
      %p296 = scmp.ne.s32.totalorder %s285, %s288
      %p297 = scmp.eq.s32.totalorder %s31, 2
      %p298 = por %p296, %p297
      %p299 = scmp.ne.s32.totalorder %s288, %s289
      %p300 = scmp.eq.s32.totalorder %s31, 0
      %p301 = por %p299, %p300
      %p302 = scmp.ne.s32.totalorder %s288, %s289
      %p303 = scmp.eq.s32.totalorder %s32, 2
      %p304 = por %p302, %p303
      %p306 = scmp.ne.s32.totalorder %s289, %s305
      %p307 = scmp.eq.s32.totalorder %s32, 0
      %p308 = por %p306, %p307
      %p309 = scmp.le.s32.totalorder 1, %s26
      %p310 = scmp.lt.s32.totalorder %s26, 4
      %p311 = pnand %p309, %p310
      %p312 = pneg %p311
      // Predicated region
      $region9: #{tpu_custom_call.1} parent=5 // pred_check
        _
      $region10: #{tpu_custom_call.1} parent=5 // pred_check_branch
        %314 = sbr.rel (%p311) target = $region12
      $region11: #{tpu_custom_call.1} parent=5 // pred_region
        %s315 = ssub.s32 %s26, 1
        // Predicated region
        $region13: #{tpu_custom_call.1} parent=11 // pred_check
          %p316 = pneg %p92
        $region14: #{tpu_custom_call.1} parent=11 // pred_check_branch
          %318 = sbr.rel (%p316) target = $region16
        $region15: #{tpu_custom_call.1} parent=11 // pred_region
          %p319 = scmp.lt.s32.totalorder %s35, 0
          %s320 = scalar_select %p319, %s35, 0
          %s321 = smul.addr %s320, 2
          %s322 = scalar_lea.vmem %s1, %s321
        $region16: #{tpu_custom_call.1} parent=11 // pred_fallthru
          _
        // Predicated region
        $region17: #{tpu_custom_call.1} parent=11 // pred_check
          %p323 = pneg %p139
        $region18: #{tpu_custom_call.1} parent=11 // pred_check_branch
          %325 = sbr.rel (%p323) target = $region20
        $region19: #{tpu_custom_call.1} parent=11 // pred_region
          _
        $region20: #{tpu_custom_call.1} parent=11 // pred_fallthru
          _
        // Predicated region
        $region21: #{tpu_custom_call.1} parent=11 // pred_check
          %p326 = pneg %p160
        $region22: #{tpu_custom_call.1} parent=11 // pred_check_branch
          %328 = sbr.rel (%p326) target = $region24
        $region23: #{tpu_custom_call.1} parent=11 // pred_region
          %s330 = ssub.s32 8192, 8192
          %331 = vsyncadd [#allocation7], %s330
          %s332 = sshll.u32 [#allocation8], 4
          %s333 = int_to_ptr.vmem [resolvable:$true] %s332
          %338 = dma.hbm_to_vmem [thread:$0]  %s4, 8192, %s333, [#allocation7], 128, 128, 8
        $region24: #{tpu_custom_call.1} parent=11 // pred_fallthru
          _
        // Predicated region
        $region25: #{tpu_custom_call.1} parent=11 // pred_check
          %p339 = pneg %p181
        $region26: #{tpu_custom_call.1} parent=11 // pred_check_branch
          %341 = sbr.rel (%p339) target = $region28
        $region27: #{tpu_custom_call.1} parent=11 // pred_region
          _
        $region28: #{tpu_custom_call.1} parent=11 // pred_fallthru
          _
        // Predicated region
        $region29: #{tpu_custom_call.1} parent=11 // pred_check
          %p342 = pneg %p202
        $region30: #{tpu_custom_call.1} parent=11 // pred_check_branch
          %344 = sbr.rel (%p342) target = $region32
        $region31: #{tpu_custom_call.1} parent=11 // pred_region
          %s346 = ssub.s32 4096, 4096
          %347 = vsyncadd [#allocation10], %s346
          %s348 = sshll.u32 [#allocation9], 4
          %s349 = int_to_ptr.vmem [resolvable:$true] %s348
          %354 = dma.hbm_to_vmem [thread:$0]  %s6, 4096, %s349, [#allocation10], 256, 256, 16
        $region32: #{tpu_custom_call.1} parent=11 // pred_fallthru
          _
        // Predicated region
        $region33: #{tpu_custom_call.1} parent=11 // pred_check
          %p355 = pneg %p223
        $region34: #{tpu_custom_call.1} parent=11 // pred_check_branch
          %357 = sbr.rel (%p355) target = $region36
        $region35: #{tpu_custom_call.1} parent=11 // pred_region
          _
        $region36: #{tpu_custom_call.1} parent=11 // pred_fallthru
          _
      $region12: #{tpu_custom_call.1} parent=5 // pred_fallthru
        _
      %p358 = scmp.lt.s32.totalorder %s26, 3
      // Predicated region
      $region37: #{tpu_custom_call.1} parent=5 // pred_check
        %p359 = pneg %p358
      $region38: #{tpu_custom_call.1} parent=5 // pred_check_branch
        %361 = sbr.rel (%p359) target = $region40
      $region39: #{tpu_custom_call.1} parent=5 // pred_region
        // Predicated region
        $region41: #{tpu_custom_call.1} parent=39 // pred_check
          %p362 = pneg %p60
        $region42: #{tpu_custom_call.1} parent=39 // pred_check_branch
          %364 = sbr.rel (%p362) target = $region44
        $region43: #{tpu_custom_call.1} parent=39 // pred_region
          %s365 = sand.u32 %s50, 1
          %s366 = scalar_lea.sflag [#allocation4], %s365
          %s367 = sand.u32 %s50, 1
          %s368 = smul.addr %s367, 2
          %s369 = scalar_lea.vmem [#allocation3], %s368
          %s370 = smul.u32 2, %s34
          %s372 = ssub.s32 32, 32
          %373 = vsyncadd %s366, %s372
          %s374 = smul.addr %s33, 6
          %s375 = sadd.s32 %s370, %s374
          %s376 = smul.addr %s375, 16
          %s377 = scalar_lea.hbm %s0, %s376
          %s379 = sshll.u32 %s369, 4
          %s380 = int_to_ptr.vmem [resolvable:$true] %s379
          %382 = dma.hbm_to_vmem [thread:$0]  %s377, 32, %s380, %s366
        $region44: #{tpu_custom_call.1} parent=39 // pred_fallthru
          _
        // Predicated region
        $region45: #{tpu_custom_call.1} parent=39 // pred_check
          %p383 = pneg %p112
        $region46: #{tpu_custom_call.1} parent=39 // pred_check_branch
          %385 = sbr.rel (%p383) target = $region48
        $region47: #{tpu_custom_call.1} parent=39 // pred_region
          %s386 = sand.u32 %s26, 1
          %s387 = scalar_lea.sflag [#allocation7], %s386
          %s388 = sand.u32 %s102, 1
          %s389 = smul.addr %s388, 512
          %s390 = scalar_lea.vmem [#allocation6], %s389
          %s391 = smul.u32 32, %s34
          %s393 = ssub.s32 8192, 8192
          %394 = vsyncadd %s387, %s393
          %s395 = smul.addr %s391, 4
          %s396 = smul.addr %s395, 64
          %s397 = scalar_lea.hbm %s2, %s396
          %s398 = sshll.u32 %s390, 4
          %s399 = int_to_ptr.vmem [resolvable:$true] %s398
          %404 = dma.hbm_to_vmem [thread:$0]  %s397, 8192, %s399, %s387, 256, 256, 16
        $region48: #{tpu_custom_call.1} parent=39 // pred_fallthru
          _
      $region40: #{tpu_custom_call.1} parent=5 // pred_fallthru
        _
      %p405 = scmp.le.s32.totalorder 1, %s26
      %p406 = scmp.lt.s32.totalorder %s26, 4
      %p407 = pnand %p405, %p406
      %p408 = pneg %p407
      // Predicated region
      $region49: #{tpu_custom_call.1} parent=5 // pred_check
        _
      $region50: #{tpu_custom_call.1} parent=5 // pred_check_branch
        %410 = sbr.rel (%p407) target = $region52
      $region51: #{tpu_custom_call.1} parent=5 // pred_region
        %s411 = ssub.s32 %s26, 1
        %s412 = sand.u32 %s53, 1
        %s413 = scalar_lea.sflag [#allocation4], %s412
        %s414 = sand.u32 %s53, 1
        %s415 = smul.addr %s414, 2
        %s416 = scalar_lea.vmem [#allocation3], %s415
        // Predicated region
        $region53: #{tpu_custom_call.1} parent=51 // pred_check
          %p417 = pneg %p66
        $region54: #{tpu_custom_call.1} parent=51 // pred_check_branch
          %419 = sbr.rel (%p417) target = $region56
        $region55: #{tpu_custom_call.1} parent=51 // pred_region
          %420 = dma.done %s413, 32
        $region56: #{tpu_custom_call.1} parent=51 // pred_fallthru
          _
        %s421 = sand.u32 %s31, 1
        %s422 = scalar_lea.sflag [#allocation7], %s421
        %s423 = sand.u32 %s105, 1
        %s424 = smul.addr %s423, 512
        %s425 = scalar_lea.vmem [#allocation6], %s424
        // Predicated region
        $region57: #{tpu_custom_call.1} parent=51 // pred_check
          %p426 = pneg %p118
        $region58: #{tpu_custom_call.1} parent=51 // pred_check_branch
          %428 = sbr.rel (%p426) target = $region60
        $region59: #{tpu_custom_call.1} parent=51 // pred_region
          %429 = dma.done %s422, 8192
        $region60: #{tpu_custom_call.1} parent=51 // pred_fallthru
          _
        // Predicated region
        $region61: #{tpu_custom_call.1} parent=51 // pred_check
          %p430 = pneg %p160
        $region62: #{tpu_custom_call.1} parent=51 // pred_check_branch
          %432 = sbr.rel (%p430) target = $region64
        $region63: #{tpu_custom_call.1} parent=51 // pred_region
          %433 = dma.done [#allocation7], 8192
        $region64: #{tpu_custom_call.1} parent=51 // pred_fallthru
          _
        // Predicated region
        $region65: #{tpu_custom_call.1} parent=51 // pred_check
          %p434 = pneg %p202
        $region66: #{tpu_custom_call.1} parent=51 // pred_check_branch
          %436 = sbr.rel (%p434) target = $region68
        $region67: #{tpu_custom_call.1} parent=51 // pred_region
          %437 = dma.done [#allocation10], 4096
        $region68: #{tpu_custom_call.1} parent=51 // pred_fallthru
          _
        %s438 = sand.u32 %s53, 1
        %s439 = scalar_lea.sflag [#allocation4], %s438
        %s440 = sand.u32 %s53, 1
        %s441 = smul.addr %s440, 2
        %s442 = scalar_lea.vmem [#allocation3], %s441
        %p443 = pneg %p66
        %p444 = pneg %p63
        %p445 = scmp.lt.s32.totalorder %s35, 0
        %s446 = scalar_select %p445, %s35, 0
        %s447 = smul.addr %s446, 2
        %s448 = scalar_lea.vmem %s1, %s447
        %p449 = pneg %p92
        %p450 = pneg %p89
        %s451 = sand.u32 %s31, 1
        %s452 = scalar_lea.sflag [#allocation7], %s451
        %s453 = sand.u32 %s105, 1
        %s454 = smul.addr %s453, 512
        %s455 = scalar_lea.vmem [#allocation6], %s454
        %p456 = pneg %p118
        %p457 = pneg %p115
        %p458 = pneg %p139
        %p459 = pneg %p136
        %p460 = pneg %p160
        %p461 = pneg %p157
        %p462 = pneg %p181
        %p463 = pneg %p178
        %p464 = pneg %p202
        %p465 = pneg %p199
        %p466 = pneg %p223
        %p467 = pneg %p220
        %p468 = pneg %p249
        %p469 = pneg %p246
        %p470 = pneg %p275
        %p471 = pneg %p272
        %p472 = pneg %p301
        %p473 = pneg %p298
        %s474 = smul.u32 2, %s36
        %p475 = scmp.lt.s32.totalorder %s35, 0
        %s476 = scalar_select %p475, %s35, 0
        %s477 = smul.addr %s476, 2
        %s478 = scalar_lea.vmem %s1, %s477
        %s479 = smul.u32 32, %s36
        %p481 = scmp.eq.s32.totalorder %s36, 0
        // Predicated region
        $region69: #{tpu_custom_call.1} parent=51 // pred_check
          %p482 = pneg %p481
        $region70: #{tpu_custom_call.1} parent=51 // pred_check_branch
          %484 = sbr.rel (%p482) target = $region72
        $region71: #{tpu_custom_call.1} parent=51 // pred_region
          %485 = vst [vmem:[#allocation2] sm:$0xff] 0.0
        $region72: #{tpu_custom_call.1} parent=51 // pred_fallthru
          _
        %v486 = vld [vmem:[#allocation2] sm:$0xff]
        %v487 = vld [vmem:[%s416] sm:$0x3]
        %v488 = vld [vmem:[%s425] sm:$0xff]
        %v489 = vld [vmem:[%s425 + $0x8] sm:$0xff]
        %v490 = vld [vmem:[%s425 + $0x10] sm:$0xff]
        %v491 = vld [vmem:[%s425 + $0x18] sm:$0xff]
        %v492 = vld [vmem:[%s425 + $0x20] sm:$0xff]
        %v493 = vld [vmem:[%s425 + $0x28] sm:$0xff]
        %v494 = vld [vmem:[%s425 + $0x30] sm:$0xff]
        %v495 = vld [vmem:[%s425 + $0x38] sm:$0xff]
        %v496 = vld [vmem:[%s425 + $0x40] sm:$0xff]
        %v497 = vld [vmem:[%s425 + $0x48] sm:$0xff]
        %v498 = vld [vmem:[%s425 + $0x50] sm:$0xff]
        %v499 = vld [vmem:[%s425 + $0x58] sm:$0xff]
        %v500 = vld [vmem:[%s425 + $0x60] sm:$0xff]
        %v501 = vld [vmem:[%s425 + $0x68] sm:$0xff]
        %v502 = vld [vmem:[%s425 + $0x70] sm:$0xff]
        %v503 = vld [vmem:[%s425 + $0x78] sm:$0xff]
        %v504 = vld [vmem:[%s425 + $0x80] sm:$0xff]
        %v505 = vld [vmem:[%s425 + $0x88] sm:$0xff]
        %v506 = vld [vmem:[%s425 + $0x90] sm:$0xff]
        %v507 = vld [vmem:[%s425 + $0x98] sm:$0xff]
        %v508 = vld [vmem:[%s425 + $0xa0] sm:$0xff]
        %v509 = vld [vmem:[%s425 + $0xa8] sm:$0xff]
        %v510 = vld [vmem:[%s425 + $0xb0] sm:$0xff]
        %v511 = vld [vmem:[%s425 + $0xb8] sm:$0xff]
        %v512 = vld [vmem:[%s425 + $0xc0] sm:$0xff]
        %v513 = vld [vmem:[%s425 + $0xc8] sm:$0xff]
        %v514 = vld [vmem:[%s425 + $0xd0] sm:$0xff]
        %v515 = vld [vmem:[%s425 + $0xd8] sm:$0xff]
        %v516 = vld [vmem:[%s425 + $0xe0] sm:$0xff]
        %v517 = vld [vmem:[%s425 + $0xe8] sm:$0xff]
        %v518 = vld [vmem:[%s425 + $0xf0] sm:$0xff]
        %v519 = vld [vmem:[%s425 + $0xf8] sm:$0xff]
        %v520 = vld [vmem:[%s425 + $0x100] sm:$0xff]
        %v521 = vld [vmem:[%s425 + $0x108] sm:$0xff]
        %v522 = vld [vmem:[%s425 + $0x110] sm:$0xff]
        %v523 = vld [vmem:[%s425 + $0x118] sm:$0xff]
        %v524 = vld [vmem:[%s425 + $0x120] sm:$0xff]
        %v525 = vld [vmem:[%s425 + $0x128] sm:$0xff]
        %v526 = vld [vmem:[%s425 + $0x130] sm:$0xff]
        %v527 = vld [vmem:[%s425 + $0x138] sm:$0xff]
        %v528 = vld [vmem:[%s425 + $0x140] sm:$0xff]
        %v529 = vld [vmem:[%s425 + $0x148] sm:$0xff]
        %v530 = vld [vmem:[%s425 + $0x150] sm:$0xff]
        %v531 = vld [vmem:[%s425 + $0x158] sm:$0xff]
        %v532 = vld [vmem:[%s425 + $0x160] sm:$0xff]
        %v533 = vld [vmem:[%s425 + $0x168] sm:$0xff]
        %v534 = vld [vmem:[%s425 + $0x170] sm:$0xff]
        %v535 = vld [vmem:[%s425 + $0x178] sm:$0xff]
        %v536 = vld [vmem:[%s425 + $0x180] sm:$0xff]
        %v537 = vld [vmem:[%s425 + $0x188] sm:$0xff]
        %v538 = vld [vmem:[%s425 + $0x190] sm:$0xff]
        %v539 = vld [vmem:[%s425 + $0x198] sm:$0xff]
        %v540 = vld [vmem:[%s425 + $0x1a0] sm:$0xff]
        %v541 = vld [vmem:[%s425 + $0x1a8] sm:$0xff]
        %v542 = vld [vmem:[%s425 + $0x1b0] sm:$0xff]
        %v543 = vld [vmem:[%s425 + $0x1b8] sm:$0xff]
        %v544 = vld [vmem:[%s425 + $0x1c0] sm:$0xff]
        %v545 = vld [vmem:[%s425 + $0x1c8] sm:$0xff]
        %v546 = vld [vmem:[%s425 + $0x1d0] sm:$0xff]
        %v547 = vld [vmem:[%s425 + $0x1d8] sm:$0xff]
        %v548 = vld [vmem:[%s425 + $0x1e0] sm:$0xff]
        %v549 = vld [vmem:[%s425 + $0x1e8] sm:$0xff]
        %v550 = vld [vmem:[%s425 + $0x1f0] sm:$0xff]
        %v551 = vld [vmem:[%s425 + $0x1f8] sm:$0xff]
        %v554 = vunpack.c.l.s4 1966171168
        %v555 = vunpack.c.0.s8 %v554
        %v556 = vlaneseq
        %v557 = vshrl.u32 %v556, 7
        %v558 = vsub.s32 %v555, %v557
        %v559 = vrot.slane %v487, %v558
        %v560 = vcombine.high %v559, %v559
        %v562 = vunpack.c.l.s4 1966171168
        %v563 = vunpack.c.0.s8 %v562
        %v564 = vlaneseq
        %v565 = vshrl.u32 %v564, 7
        %v566 = vsub.s32 %v563, %v565
        %v567 = vrot.slane %v559, %v566
        %v569 = vunpack.c.l.s4 1966171168
        %v570 = vunpack.c.0.s8 %v569
        %v571 = vlaneseq
        %v572 = vshrl.u32 %v571, 7
        %v573 = vsub.s32 %v570, %v572
        %v574 = vrot.slane %v560, %v573
        %v641 = vunpack.c.l.b16 %v488
        %v642 = vunpack.c.h.b16 %v488
        %v643 = vunpack.c.l.b16 %v489
        %v644 = vunpack.c.h.b16 %v489
        %v645 = vunpack.c.l.b16 %v490
        %v646 = vunpack.c.h.b16 %v490
        %v647 = vunpack.c.l.b16 %v491
        %v648 = vunpack.c.h.b16 %v491
        %v649 = vunpack.c.l.b16 %v492
        %v650 = vunpack.c.h.b16 %v492
        %v651 = vunpack.c.l.b16 %v493
        %v652 = vunpack.c.h.b16 %v493
        %v653 = vunpack.c.l.b16 %v494
        %v654 = vunpack.c.h.b16 %v494
        %v655 = vunpack.c.l.b16 %v495
        %v656 = vunpack.c.h.b16 %v495
        %v657 = vunpack.c.l.b16 %v496
        %v658 = vunpack.c.h.b16 %v496
        %v659 = vunpack.c.l.b16 %v497
        %v660 = vunpack.c.h.b16 %v497
        %v661 = vunpack.c.l.b16 %v498
        %v662 = vunpack.c.h.b16 %v498
        %v663 = vunpack.c.l.b16 %v499
        %v664 = vunpack.c.h.b16 %v499
        %v665 = vunpack.c.l.b16 %v500
        %v666 = vunpack.c.h.b16 %v500
        %v667 = vunpack.c.l.b16 %v501
        %v668 = vunpack.c.h.b16 %v501
        %v669 = vunpack.c.l.b16 %v502
        %v670 = vunpack.c.h.b16 %v502
        %v671 = vunpack.c.l.b16 %v503
        %v672 = vunpack.c.h.b16 %v503
        %v673 = vunpack.c.l.b16 %v504
        %v674 = vunpack.c.h.b16 %v504
        %v675 = vunpack.c.l.b16 %v505
        %v676 = vunpack.c.h.b16 %v505
        %v677 = vunpack.c.l.b16 %v506
        %v678 = vunpack.c.h.b16 %v506
        %v679 = vunpack.c.l.b16 %v507
        %v680 = vunpack.c.h.b16 %v507
        %v681 = vunpack.c.l.b16 %v508
        %v682 = vunpack.c.h.b16 %v508
        %v683 = vunpack.c.l.b16 %v509
        %v684 = vunpack.c.h.b16 %v509
        %v685 = vunpack.c.l.b16 %v510
        %v686 = vunpack.c.h.b16 %v510
        %v687 = vunpack.c.l.b16 %v511
        %v688 = vunpack.c.h.b16 %v511
        %v689 = vunpack.c.l.b16 %v512
        %v690 = vunpack.c.h.b16 %v512
        %v691 = vunpack.c.l.b16 %v513
        %v692 = vunpack.c.h.b16 %v513
        %v693 = vunpack.c.l.b16 %v514
        %v694 = vunpack.c.h.b16 %v514
        %v695 = vunpack.c.l.b16 %v515
        %v696 = vunpack.c.h.b16 %v515
        %v697 = vunpack.c.l.b16 %v516
        %v698 = vunpack.c.h.b16 %v516
        %v699 = vunpack.c.l.b16 %v517
        %v700 = vunpack.c.h.b16 %v517
        %v701 = vunpack.c.l.b16 %v518
        %v702 = vunpack.c.h.b16 %v518
        %v703 = vunpack.c.l.b16 %v519
        %v704 = vunpack.c.h.b16 %v519
        %v705 = vunpack.c.l.b16 %v520
        %v706 = vunpack.c.h.b16 %v520
        %v707 = vunpack.c.l.b16 %v521
        %v708 = vunpack.c.h.b16 %v521
        %v709 = vunpack.c.l.b16 %v522
        %v710 = vunpack.c.h.b16 %v522
        %v711 = vunpack.c.l.b16 %v523
        %v712 = vunpack.c.h.b16 %v523
        %v713 = vunpack.c.l.b16 %v524
        %v714 = vunpack.c.h.b16 %v524
        %v715 = vunpack.c.l.b16 %v525
        %v716 = vunpack.c.h.b16 %v525
        %v717 = vunpack.c.l.b16 %v526
        %v718 = vunpack.c.h.b16 %v526
        %v719 = vunpack.c.l.b16 %v527
        %v720 = vunpack.c.h.b16 %v527
        %v721 = vunpack.c.l.b16 %v528
        %v722 = vunpack.c.h.b16 %v528
        %v723 = vunpack.c.l.b16 %v529
        %v724 = vunpack.c.h.b16 %v529
        %v725 = vunpack.c.l.b16 %v530
        %v726 = vunpack.c.h.b16 %v530
        %v727 = vunpack.c.l.b16 %v531
        %v728 = vunpack.c.h.b16 %v531
        %v729 = vunpack.c.l.b16 %v532
        %v730 = vunpack.c.h.b16 %v532
        %v731 = vunpack.c.l.b16 %v533
        %v732 = vunpack.c.h.b16 %v533
        %v733 = vunpack.c.l.b16 %v534
        %v734 = vunpack.c.h.b16 %v534
        %v735 = vunpack.c.l.b16 %v535
        %v736 = vunpack.c.h.b16 %v535
        %v737 = vunpack.c.l.b16 %v536
        %v738 = vunpack.c.h.b16 %v536
        %v739 = vunpack.c.l.b16 %v537
        %v740 = vunpack.c.h.b16 %v537
        %v741 = vunpack.c.l.b16 %v538
        %v742 = vunpack.c.h.b16 %v538
        %v743 = vunpack.c.l.b16 %v539
        %v744 = vunpack.c.h.b16 %v539
        %v745 = vunpack.c.l.b16 %v540
        %v746 = vunpack.c.h.b16 %v540
        %v747 = vunpack.c.l.b16 %v541
        %v748 = vunpack.c.h.b16 %v541
        %v749 = vunpack.c.l.b16 %v542
        %v750 = vunpack.c.h.b16 %v542
        %v751 = vunpack.c.l.b16 %v543
        %v752 = vunpack.c.h.b16 %v543
        %v753 = vunpack.c.l.b16 %v544
        %v754 = vunpack.c.h.b16 %v544
        %v755 = vunpack.c.l.b16 %v545
        %v756 = vunpack.c.h.b16 %v545
        %v757 = vunpack.c.l.b16 %v546
        %v758 = vunpack.c.h.b16 %v546
        %v759 = vunpack.c.l.b16 %v547
        %v760 = vunpack.c.h.b16 %v547
        %v761 = vunpack.c.l.b16 %v548
        %v762 = vunpack.c.h.b16 %v548
        %v763 = vunpack.c.l.b16 %v549
        %v764 = vunpack.c.h.b16 %v549
        %v765 = vunpack.c.l.b16 %v550
        %v766 = vunpack.c.h.b16 %v550
        %v767 = vunpack.c.l.b16 %v551
        %v768 = vunpack.c.h.b16 %v551
        %v769 = vpack.c.b16 %v645, %v641
        %v770 = vpack.c.b16 %v646, %v642
        %v771 = vpack.c.b16 %v647, %v643
        %v772 = vpack.c.b16 %v648, %v644
        %v773 = vpack.c.b16 %v653, %v649
        %v774 = vpack.c.b16 %v654, %v650
        %v775 = vpack.c.b16 %v655, %v651
        %v776 = vpack.c.b16 %v656, %v652
        %v777 = vpack.c.b16 %v661, %v657
        %v778 = vpack.c.b16 %v662, %v658
        %v779 = vpack.c.b16 %v663, %v659
        %v780 = vpack.c.b16 %v664, %v660
        %v781 = vpack.c.b16 %v669, %v665
        %v782 = vpack.c.b16 %v670, %v666
        %v783 = vpack.c.b16 %v671, %v667
        %v784 = vpack.c.b16 %v672, %v668
        %v785 = vpack.c.b16 %v677, %v673
        %v786 = vpack.c.b16 %v678, %v674
        %v787 = vpack.c.b16 %v679, %v675
        %v788 = vpack.c.b16 %v680, %v676
        %v789 = vpack.c.b16 %v685, %v681
        %v790 = vpack.c.b16 %v686, %v682
        %v791 = vpack.c.b16 %v687, %v683
        %v792 = vpack.c.b16 %v688, %v684
        %v793 = vpack.c.b16 %v693, %v689
        %v794 = vpack.c.b16 %v694, %v690
        %v795 = vpack.c.b16 %v695, %v691
        %v796 = vpack.c.b16 %v696, %v692
        %v797 = vpack.c.b16 %v701, %v697
        %v798 = vpack.c.b16 %v702, %v698
        %v799 = vpack.c.b16 %v703, %v699
        %v800 = vpack.c.b16 %v704, %v700
        %v801 = vpack.c.b16 %v709, %v705
        %v802 = vpack.c.b16 %v710, %v706
        %v803 = vpack.c.b16 %v711, %v707
        %v804 = vpack.c.b16 %v712, %v708
        %v805 = vpack.c.b16 %v717, %v713
        %v806 = vpack.c.b16 %v718, %v714
        %v807 = vpack.c.b16 %v719, %v715
        %v808 = vpack.c.b16 %v720, %v716
        %v809 = vpack.c.b16 %v725, %v721
        %v810 = vpack.c.b16 %v726, %v722
        %v811 = vpack.c.b16 %v727, %v723
        %v812 = vpack.c.b16 %v728, %v724
        %v813 = vpack.c.b16 %v733, %v729
        %v814 = vpack.c.b16 %v734, %v730
        %v815 = vpack.c.b16 %v735, %v731
        %v816 = vpack.c.b16 %v736, %v732
        %v817 = vpack.c.b16 %v741, %v737
        %v818 = vpack.c.b16 %v742, %v738
        %v819 = vpack.c.b16 %v743, %v739
        %v820 = vpack.c.b16 %v744, %v740
        %v821 = vpack.c.b16 %v749, %v745
        %v822 = vpack.c.b16 %v750, %v746
        %v823 = vpack.c.b16 %v751, %v747
        %v824 = vpack.c.b16 %v752, %v748
        %v825 = vpack.c.b16 %v757, %v753
        %v826 = vpack.c.b16 %v758, %v754
        %v827 = vpack.c.b16 %v759, %v755
        %v828 = vpack.c.b16 %v760, %v756
        %v829 = vpack.c.b16 %v765, %v761
        %v830 = vpack.c.b16 %v766, %v762
        %v831 = vpack.c.b16 %v767, %v763
        %v832 = vpack.c.b16 %v768, %v764
        %897 = vmatprep.subr.bf16.mxu0 %v770
        %898 = vmatpush1.bf16.msra.mxu0 %v769
        %899 = vmatprep.subr.bf16.mxu0 %v774
        %900 = vmatpush1.bf16.msra.mxu0 %v773
        %901 = vmatprep.subr.bf16.mxu0 %v778
        %902 = vmatpush1.bf16.msra.mxu0 %v777
        %903 = vmatprep.subr.bf16.mxu0 %v782
        %904 = vmatpush1.bf16.msra.mxu0 %v781
        %905 = vmatprep.subr.bf16.mxu0 %v786
        %906 = vmatpush1.bf16.msra.mxu0 %v785
        %907 = vmatprep.subr.bf16.mxu0 %v790
        %908 = vmatpush1.bf16.msra.mxu0 %v789
        %909 = vmatprep.subr.bf16.mxu0 %v794
        %910 = vmatpush1.bf16.msra.mxu0 %v793
        %911 = vmatprep.subr.bf16.mxu0 %v798
        %912 = vmatpush1.bf16.msra.mxu0 %v797
        %913 = vmatprep.subr.bf16.mxu0 %v802
        %914 = vmatpush1.bf16.msra.mxu0 %v801
        %915 = vmatprep.subr.bf16.mxu0 %v806
        %916 = vmatpush1.bf16.msra.mxu0 %v805
        %917 = vmatprep.subr.bf16.mxu0 %v810
        %918 = vmatpush1.bf16.msra.mxu0 %v809
        %919 = vmatprep.subr.bf16.mxu0 %v814
        %920 = vmatpush1.bf16.msra.mxu0 %v813
        %921 = vmatprep.subr.bf16.mxu0 %v818
        %922 = vmatpush1.bf16.msra.mxu0 %v817
        %923 = vmatprep.subr.bf16.mxu0 %v822
        %924 = vmatpush1.bf16.msra.mxu0 %v821
        %925 = vmatprep.subr.bf16.mxu0 %v826
        %926 = vmatpush1.bf16.msra.mxu0 %v825
        %927 = vmatprep.subr.bf16.mxu0 %v830
        %928 = vmatpush1.bf16.msra.mxu0 %v829
        %929 = vmatprep.mubr.bf16.mxu0 %v574
        %930 = vmatmul.mubr.bf16.gmra.mrb[0].mxu0 %v567
        %v931 = vpop.f32.mrb[0].mxu0
        %v932 = vadd.f32 0.0, %v931
        %v933 = vpop.f32.mrb[0].mxu0
        %v934 = vadd.f32 0.0, %v933
        %v935 = vpop.f32.mrb[0].mxu0
        %v936 = vpop.f32.mrb[0].mxu0
        %937 = vdwg.mxu0
        %938 = vmatprep.subr.bf16.mxu0 %v772
        %939 = vmatpush1.bf16.msra.mxu0 %v771
        %940 = vmatprep.subr.bf16.mxu0 %v776
        %941 = vmatpush1.bf16.msra.mxu0 %v775
        %942 = vmatprep.subr.bf16.mxu0 %v780
        %943 = vmatpush1.bf16.msra.mxu0 %v779
        %944 = vmatprep.subr.bf16.mxu0 %v784
        %945 = vmatpush1.bf16.msra.mxu0 %v783
        %946 = vmatprep.subr.bf16.mxu0 %v788
        %947 = vmatpush1.bf16.msra.mxu0 %v787
        %948 = vmatprep.subr.bf16.mxu0 %v792
        %949 = vmatpush1.bf16.msra.mxu0 %v791
        %950 = vmatprep.subr.bf16.mxu0 %v796
        %951 = vmatpush1.bf16.msra.mxu0 %v795
        %952 = vmatprep.subr.bf16.mxu0 %v800
        %953 = vmatpush1.bf16.msra.mxu0 %v799
        %954 = vmatprep.subr.bf16.mxu0 %v804
        %955 = vmatpush1.bf16.msra.mxu0 %v803
        %956 = vmatprep.subr.bf16.mxu0 %v808
        %957 = vmatpush1.bf16.msra.mxu0 %v807
        %958 = vmatprep.subr.bf16.mxu0 %v812
        %959 = vmatpush1.bf16.msra.mxu0 %v811
        %960 = vmatprep.subr.bf16.mxu0 %v816
        %961 = vmatpush1.bf16.msra.mxu0 %v815
        %962 = vmatprep.subr.bf16.mxu0 %v820
        %963 = vmatpush1.bf16.msra.mxu0 %v819
        %964 = vmatprep.subr.bf16.mxu0 %v824
        %965 = vmatpush1.bf16.msra.mxu0 %v823
        %966 = vmatprep.subr.bf16.mxu0 %v828
        %967 = vmatpush1.bf16.msra.mxu0 %v827
        %968 = vmatprep.subr.bf16.mxu0 %v832
        %969 = vmatpush1.bf16.msra.mxu0 %v831
        %970 = vmatprep.mubr.bf16.mxu0 %v574
        %971 = vmatmul.mubr.bf16.gmra.mrb[0].mxu0 %v567
        %v972 = vpop.f32.mrb[0].mxu0
        %v973 = vadd.f32 0.0, %v972
        %v974 = vpop.f32.mrb[0].mxu0
        %v975 = vadd.f32 0.0, %v974
        %v976 = vpop.f32.mrb[0].mxu0
        %v977 = vpop.f32.mrb[0].mxu0
        %978 = vdwg.mxu0
        %v983 = vcombine.low %v932, %v934
        %v984 = vcombine.low %v973, %v975
        %v986 = vunpack.c.l.s4 1983009808
        %v987 = vunpack.c.0.s8 %v986
        %v988 = vlaneseq
        %v989 = vshrl.u32 %v988, 7
        %v990 = vsub.s32 %v987, %v989
        %v991 = vrot.slane %v983, %v990
        %v993 = vunpack.c.l.s4 1983009808
        %v994 = vunpack.c.0.s8 %v993
        %v995 = vlaneseq
        %v996 = vshrl.u32 %v995, 7
        %v997 = vsub.s32 %v994, %v996
        %v998 = vrot.slane %v984, %v997
        %v999 = vcombine.low %v991, %v998
        %v1001 = vadd.f32 %v486, %v999
        %1002 = vst [vmem:[#allocation2] sm:$0xff] %v1001
        %p1003 = scmp.eq.s32.totalorder %s36, 2
        // Predicated region
        $region73: #{tpu_custom_call.1} parent=51 // pred_check
          %p1004 = pneg %p1003
        $region74: #{tpu_custom_call.1} parent=51 // pred_check_branch
          %1006 = sbr.rel (%p1004) target = $region76
        $region75: #{tpu_custom_call.1} parent=51 // pred_region
          %v1007 = vld [vmem:[#allocation2] sm:$0xff]
          %v1008 = vld [vmem:[%s3] sm:$0xf]
          %v1010 = vlaneseq
          %v1011 = vshrl.u32 %v1010, 7
          %v1012 = vsub.s32 0, %v1011
          %v1013 = vrot.slane %v1008, %v1012
          %v1014 = vlaneseq
          %v1015 = vshrl.u32 %v1014, 7
          %v1016 = vsub.s32 1, %v1015
          %v1017 = vrot.slane %v1008, %v1016
          %v1018 = vlaneseq
          %v1019 = vshrl.u32 %v1018, 7
          %v1020 = vsub.s32 2, %v1019
          %v1021 = vrot.slane %v1008, %v1020
          %v1022 = vlaneseq
          %v1023 = vshrl.u32 %v1022, 7
          %v1024 = vsub.s32 3, %v1023
          %v1025 = vrot.slane %v1008, %v1024
          %v1026 = vcombine.low %v1013, %v1017
          %v1027 = vcombine.low %v1021, %v1025
          %v1029 = vunpack.c.l.s4 1983009808
          %v1030 = vunpack.c.0.s8 %v1029
          %v1031 = vlaneseq
          %v1032 = vshrl.u32 %v1031, 7
          %v1033 = vsub.s32 %v1030, %v1032
          %v1034 = vrot.slane %v1026, %v1033
          %v1036 = vunpack.c.l.s4 1983009808
          %v1037 = vunpack.c.0.s8 %v1036
          %v1038 = vlaneseq
          %v1039 = vshrl.u32 %v1038, 7
          %v1040 = vsub.s32 %v1037, %v1039
          %v1041 = vrot.slane %v1027, %v1040
          %v1042 = vcombine.low %v1034, %v1041
          %v1044 = vadd.f32 %v1007, %v1042
          %v1045 = vmax.f32 %v1044, 0.0
          %v1047 = vcombine.high %v1045, %v1045
          %v1049 = vunpack.c.l.s4 1983009808
          %v1050 = vunpack.c.0.s8 %v1049
          %v1051 = vlaneseq
          %v1052 = vshrl.u32 %v1051, 7
          %v1053 = vsub.s32 %v1050, %v1052
          %v1054 = vrot.slane %v1045, %v1053
          %v1056 = vunpack.c.l.s4 1983009808
          %v1057 = vunpack.c.0.s8 %v1056
          %v1058 = vlaneseq
          %v1059 = vshrl.u32 %v1058, 7
          %v1060 = vsub.s32 %v1057, %v1059
          %v1061 = vrot.slane %v1047, %v1060
          %v1062 = vcombine.high %v1054, %v1054
          %v1063 = vcombine.high %v1061, %v1061
          %v1068 = vpack.c.bf16 %v1054, %v1054
          %v1069 = vpack.c.bf16 %v1062, %v1062
          %v1070 = vpack.c.bf16 %v1061, %v1061
          %v1071 = vpack.c.bf16 %v1063, %v1063
          %v1072 = vld [vmem:[#allocation8] sm:$0xff]
          %v1073 = vld [vmem:[#allocation8 + $0x8] sm:$0xff]
          %v1074 = vld [vmem:[#allocation8 + $0x10] sm:$0xff]
          %v1075 = vld [vmem:[#allocation8 + $0x18] sm:$0xff]
          %v1076 = vld [vmem:[#allocation8 + $0x20] sm:$0xff]
          %v1077 = vld [vmem:[#allocation8 + $0x28] sm:$0xff]
          %v1078 = vld [vmem:[#allocation8 + $0x30] sm:$0xff]
          %v1079 = vld [vmem:[#allocation8 + $0x38] sm:$0xff]
          %v1080 = vld [vmem:[#allocation8 + $0x40] sm:$0xff]
          %v1081 = vld [vmem:[#allocation8 + $0x48] sm:$0xff]
          %v1082 = vld [vmem:[#allocation8 + $0x50] sm:$0xff]
          %v1083 = vld [vmem:[#allocation8 + $0x58] sm:$0xff]
          %v1084 = vld [vmem:[#allocation8 + $0x60] sm:$0xff]
          %v1085 = vld [vmem:[#allocation8 + $0x68] sm:$0xff]
          %v1086 = vld [vmem:[#allocation8 + $0x70] sm:$0xff]
          %v1087 = vld [vmem:[#allocation8 + $0x78] sm:$0xff]
          %v1088 = vld [vmem:[#allocation8 + $0x80] sm:$0xff]
          %v1089 = vld [vmem:[#allocation8 + $0x88] sm:$0xff]
          %v1090 = vld [vmem:[#allocation8 + $0x90] sm:$0xff]
          %v1091 = vld [vmem:[#allocation8 + $0x98] sm:$0xff]
          %v1092 = vld [vmem:[#allocation8 + $0xa0] sm:$0xff]
          %v1093 = vld [vmem:[#allocation8 + $0xa8] sm:$0xff]
          %v1094 = vld [vmem:[#allocation8 + $0xb0] sm:$0xff]
          %v1095 = vld [vmem:[#allocation8 + $0xb8] sm:$0xff]
          %v1096 = vld [vmem:[#allocation8 + $0xc0] sm:$0xff]
          %v1097 = vld [vmem:[#allocation8 + $0xc8] sm:$0xff]
          %v1098 = vld [vmem:[#allocation8 + $0xd0] sm:$0xff]
          %v1099 = vld [vmem:[#allocation8 + $0xd8] sm:$0xff]
          %v1100 = vld [vmem:[#allocation8 + $0xe0] sm:$0xff]
          %v1101 = vld [vmem:[#allocation8 + $0xe8] sm:$0xff]
          %v1102 = vld [vmem:[#allocation8 + $0xf0] sm:$0xff]
          %v1103 = vld [vmem:[#allocation8 + $0xf8] sm:$0xff]
          %v1104 = vld [vmem:[#allocation8 + $0x100] sm:$0xff]
          %v1105 = vld [vmem:[#allocation8 + $0x108] sm:$0xff]
          %v1106 = vld [vmem:[#allocation8 + $0x110] sm:$0xff]
          %v1107 = vld [vmem:[#allocation8 + $0x118] sm:$0xff]
          %v1108 = vld [vmem:[#allocation8 + $0x120] sm:$0xff]
          %v1109 = vld [vmem:[#allocation8 + $0x128] sm:$0xff]
          %v1110 = vld [vmem:[#allocation8 + $0x130] sm:$0xff]
          %v1111 = vld [vmem:[#allocation8 + $0x138] sm:$0xff]
          %v1112 = vld [vmem:[#allocation8 + $0x140] sm:$0xff]
          %v1113 = vld [vmem:[#allocation8 + $0x148] sm:$0xff]
          %v1114 = vld [vmem:[#allocation8 + $0x150] sm:$0xff]
          %v1115 = vld [vmem:[#allocation8 + $0x158] sm:$0xff]
          %v1116 = vld [vmem:[#allocation8 + $0x160] sm:$0xff]
          %v1117 = vld [vmem:[#allocation8 + $0x168] sm:$0xff]
          %v1118 = vld [vmem:[#allocation8 + $0x170] sm:$0xff]
          %v1119 = vld [vmem:[#allocation8 + $0x178] sm:$0xff]
          %v1120 = vld [vmem:[#allocation8 + $0x180] sm:$0xff]
          %v1121 = vld [vmem:[#allocation8 + $0x188] sm:$0xff]
          %v1122 = vld [vmem:[#allocation8 + $0x190] sm:$0xff]
          %v1123 = vld [vmem:[#allocation8 + $0x198] sm:$0xff]
          %v1124 = vld [vmem:[#allocation8 + $0x1a0] sm:$0xff]
          %v1125 = vld [vmem:[#allocation8 + $0x1a8] sm:$0xff]
          %v1126 = vld [vmem:[#allocation8 + $0x1b0] sm:$0xff]
          %v1127 = vld [vmem:[#allocation8 + $0x1b8] sm:$0xff]
          %v1128 = vld [vmem:[#allocation8 + $0x1c0] sm:$0xff]
          %v1129 = vld [vmem:[#allocation8 + $0x1c8] sm:$0xff]
          %v1130 = vld [vmem:[#allocation8 + $0x1d0] sm:$0xff]
          %v1131 = vld [vmem:[#allocation8 + $0x1d8] sm:$0xff]
          %v1132 = vld [vmem:[#allocation8 + $0x1e0] sm:$0xff]
          %v1133 = vld [vmem:[#allocation8 + $0x1e8] sm:$0xff]
          %v1134 = vld [vmem:[#allocation8 + $0x1f0] sm:$0xff]
          %v1135 = vld [vmem:[#allocation8 + $0x1f8] sm:$0xff]
          %v1136 = vld [vmem:[%s5] sm:$0x3]
          %v1138 = vlaneseq
          %v1139 = vshrl.u32 %v1138, 7
          %v1140 = vsub.s32 0, %v1139
          %v1141 = vrot.slane %v1136, %v1140
          %v1142 = vlaneseq
          %v1143 = vshrl.u32 %v1142, 7
          %v1144 = vsub.s32 1, %v1143
          %v1145 = vrot.slane %v1136, %v1144
          %v1212 = vunpack.c.l.b16 %v1072
          %v1213 = vunpack.c.h.b16 %v1072
          %v1214 = vunpack.c.l.b16 %v1073
          %v1215 = vunpack.c.h.b16 %v1073
          %v1216 = vunpack.c.l.b16 %v1074
          %v1217 = vunpack.c.h.b16 %v1074
          %v1218 = vunpack.c.l.b16 %v1075
          %v1219 = vunpack.c.h.b16 %v1075
          %v1220 = vunpack.c.l.b16 %v1076
          %v1221 = vunpack.c.h.b16 %v1076
          %v1222 = vunpack.c.l.b16 %v1077
          %v1223 = vunpack.c.h.b16 %v1077
          %v1224 = vunpack.c.l.b16 %v1078
          %v1225 = vunpack.c.h.b16 %v1078
          %v1226 = vunpack.c.l.b16 %v1079
          %v1227 = vunpack.c.h.b16 %v1079
          %v1228 = vunpack.c.l.b16 %v1080
          %v1229 = vunpack.c.h.b16 %v1080
          %v1230 = vunpack.c.l.b16 %v1081
          %v1231 = vunpack.c.h.b16 %v1081
          %v1232 = vunpack.c.l.b16 %v1082
          %v1233 = vunpack.c.h.b16 %v1082
          %v1234 = vunpack.c.l.b16 %v1083
          %v1235 = vunpack.c.h.b16 %v1083
          %v1236 = vunpack.c.l.b16 %v1084
          %v1237 = vunpack.c.h.b16 %v1084
          %v1238 = vunpack.c.l.b16 %v1085
          %v1239 = vunpack.c.h.b16 %v1085
          %v1240 = vunpack.c.l.b16 %v1086
          %v1241 = vunpack.c.h.b16 %v1086
          %v1242 = vunpack.c.l.b16 %v1087
          %v1243 = vunpack.c.h.b16 %v1087
          %v1244 = vunpack.c.l.b16 %v1088
          %v1245 = vunpack.c.h.b16 %v1088
          %v1246 = vunpack.c.l.b16 %v1089
          %v1247 = vunpack.c.h.b16 %v1089
          %v1248 = vunpack.c.l.b16 %v1090
          %v1249 = vunpack.c.h.b16 %v1090
          %v1250 = vunpack.c.l.b16 %v1091
          %v1251 = vunpack.c.h.b16 %v1091
          %v1252 = vunpack.c.l.b16 %v1092
          %v1253 = vunpack.c.h.b16 %v1092
          %v1254 = vunpack.c.l.b16 %v1093
          %v1255 = vunpack.c.h.b16 %v1093
          %v1256 = vunpack.c.l.b16 %v1094
          %v1257 = vunpack.c.h.b16 %v1094
          %v1258 = vunpack.c.l.b16 %v1095
          %v1259 = vunpack.c.h.b16 %v1095
          %v1260 = vunpack.c.l.b16 %v1096
          %v1261 = vunpack.c.h.b16 %v1096
          %v1262 = vunpack.c.l.b16 %v1097
          %v1263 = vunpack.c.h.b16 %v1097
          %v1264 = vunpack.c.l.b16 %v1098
          %v1265 = vunpack.c.h.b16 %v1098
          %v1266 = vunpack.c.l.b16 %v1099
          %v1267 = vunpack.c.h.b16 %v1099
          %v1268 = vunpack.c.l.b16 %v1100
          %v1269 = vunpack.c.h.b16 %v1100
          %v1270 = vunpack.c.l.b16 %v1101
          %v1271 = vunpack.c.h.b16 %v1101
          %v1272 = vunpack.c.l.b16 %v1102
          %v1273 = vunpack.c.h.b16 %v1102
          %v1274 = vunpack.c.l.b16 %v1103
          %v1275 = vunpack.c.h.b16 %v1103
          %v1276 = vunpack.c.l.b16 %v1104
          %v1277 = vunpack.c.h.b16 %v1104
          %v1278 = vunpack.c.l.b16 %v1105
          %v1279 = vunpack.c.h.b16 %v1105
          %v1280 = vunpack.c.l.b16 %v1106
          %v1281 = vunpack.c.h.b16 %v1106
          %v1282 = vunpack.c.l.b16 %v1107
          %v1283 = vunpack.c.h.b16 %v1107
          %v1284 = vunpack.c.l.b16 %v1108
          %v1285 = vunpack.c.h.b16 %v1108
          %v1286 = vunpack.c.l.b16 %v1109
          %v1287 = vunpack.c.h.b16 %v1109
          %v1288 = vunpack.c.l.b16 %v1110
          %v1289 = vunpack.c.h.b16 %v1110
          %v1290 = vunpack.c.l.b16 %v1111
          %v1291 = vunpack.c.h.b16 %v1111
          %v1292 = vunpack.c.l.b16 %v1112
          %v1293 = vunpack.c.h.b16 %v1112
          %v1294 = vunpack.c.l.b16 %v1113
          %v1295 = vunpack.c.h.b16 %v1113
          %v1296 = vunpack.c.l.b16 %v1114
          %v1297 = vunpack.c.h.b16 %v1114
          %v1298 = vunpack.c.l.b16 %v1115
          %v1299 = vunpack.c.h.b16 %v1115
          %v1300 = vunpack.c.l.b16 %v1116
          %v1301 = vunpack.c.h.b16 %v1116
          %v1302 = vunpack.c.l.b16 %v1117
          %v1303 = vunpack.c.h.b16 %v1117
          %v1304 = vunpack.c.l.b16 %v1118
          %v1305 = vunpack.c.h.b16 %v1118
          %v1306 = vunpack.c.l.b16 %v1119
          %v1307 = vunpack.c.h.b16 %v1119
          %v1308 = vunpack.c.l.b16 %v1120
          %v1309 = vunpack.c.h.b16 %v1120
          %v1310 = vunpack.c.l.b16 %v1121
          %v1311 = vunpack.c.h.b16 %v1121
          %v1312 = vunpack.c.l.b16 %v1122
          %v1313 = vunpack.c.h.b16 %v1122
          %v1314 = vunpack.c.l.b16 %v1123
          %v1315 = vunpack.c.h.b16 %v1123
          %v1316 = vunpack.c.l.b16 %v1124
          %v1317 = vunpack.c.h.b16 %v1124
          %v1318 = vunpack.c.l.b16 %v1125
          %v1319 = vunpack.c.h.b16 %v1125
          %v1320 = vunpack.c.l.b16 %v1126
          %v1321 = vunpack.c.h.b16 %v1126
          %v1322 = vunpack.c.l.b16 %v1127
          %v1323 = vunpack.c.h.b16 %v1127
          %v1324 = vunpack.c.l.b16 %v1128
          %v1325 = vunpack.c.h.b16 %v1128
          %v1326 = vunpack.c.l.b16 %v1129
          %v1327 = vunpack.c.h.b16 %v1129
          %v1328 = vunpack.c.l.b16 %v1130
          %v1329 = vunpack.c.h.b16 %v1130
          %v1330 = vunpack.c.l.b16 %v1131
          %v1331 = vunpack.c.h.b16 %v1131
          %v1332 = vunpack.c.l.b16 %v1132
          %v1333 = vunpack.c.h.b16 %v1132
          %v1334 = vunpack.c.l.b16 %v1133
          %v1335 = vunpack.c.h.b16 %v1133
          %v1336 = vunpack.c.l.b16 %v1134
          %v1337 = vunpack.c.h.b16 %v1134
          %v1338 = vunpack.c.l.b16 %v1135
          %v1339 = vunpack.c.h.b16 %v1135
          %v1340 = vpack.c.b16 %v1214, %v1212
          %v1341 = vpack.c.b16 %v1215, %v1213
          %v1342 = vpack.c.b16 %v1218, %v1216
          %v1343 = vpack.c.b16 %v1219, %v1217
          %v1344 = vpack.c.b16 %v1222, %v1220
          %v1345 = vpack.c.b16 %v1223, %v1221
          %v1346 = vpack.c.b16 %v1226, %v1224
          %v1347 = vpack.c.b16 %v1227, %v1225
          %v1348 = vpack.c.b16 %v1230, %v1228
          %v1349 = vpack.c.b16 %v1231, %v1229
          %v1350 = vpack.c.b16 %v1234, %v1232
          %v1351 = vpack.c.b16 %v1235, %v1233
          %v1352 = vpack.c.b16 %v1238, %v1236
          %v1353 = vpack.c.b16 %v1239, %v1237
          %v1354 = vpack.c.b16 %v1242, %v1240
          %v1355 = vpack.c.b16 %v1243, %v1241
          %v1356 = vpack.c.b16 %v1246, %v1244
          %v1357 = vpack.c.b16 %v1247, %v1245
          %v1358 = vpack.c.b16 %v1250, %v1248
          %v1359 = vpack.c.b16 %v1251, %v1249
          %v1360 = vpack.c.b16 %v1254, %v1252
          %v1361 = vpack.c.b16 %v1255, %v1253
          %v1362 = vpack.c.b16 %v1258, %v1256
          %v1363 = vpack.c.b16 %v1259, %v1257
          %v1364 = vpack.c.b16 %v1262, %v1260
          %v1365 = vpack.c.b16 %v1263, %v1261
          %v1366 = vpack.c.b16 %v1266, %v1264
          %v1367 = vpack.c.b16 %v1267, %v1265
          %v1368 = vpack.c.b16 %v1270, %v1268
          %v1369 = vpack.c.b16 %v1271, %v1269
          %v1370 = vpack.c.b16 %v1274, %v1272
          %v1371 = vpack.c.b16 %v1275, %v1273
          %v1372 = vpack.c.b16 %v1278, %v1276
          %v1373 = vpack.c.b16 %v1279, %v1277
          %v1374 = vpack.c.b16 %v1282, %v1280
          %v1375 = vpack.c.b16 %v1283, %v1281
          %v1376 = vpack.c.b16 %v1286, %v1284
          %v1377 = vpack.c.b16 %v1287, %v1285
          %v1378 = vpack.c.b16 %v1290, %v1288
          %v1379 = vpack.c.b16 %v1291, %v1289
          %v1380 = vpack.c.b16 %v1294, %v1292
          %v1381 = vpack.c.b16 %v1295, %v1293
          %v1382 = vpack.c.b16 %v1298, %v1296
          %v1383 = vpack.c.b16 %v1299, %v1297
          %v1384 = vpack.c.b16 %v1302, %v1300
          %v1385 = vpack.c.b16 %v1303, %v1301
          %v1386 = vpack.c.b16 %v1306, %v1304
          %v1387 = vpack.c.b16 %v1307, %v1305
          %v1388 = vpack.c.b16 %v1310, %v1308
          %v1389 = vpack.c.b16 %v1311, %v1309
          %v1390 = vpack.c.b16 %v1314, %v1312
          %v1391 = vpack.c.b16 %v1315, %v1313
          %v1392 = vpack.c.b16 %v1318, %v1316
          %v1393 = vpack.c.b16 %v1319, %v1317
          %v1394 = vpack.c.b16 %v1322, %v1320
          %v1395 = vpack.c.b16 %v1323, %v1321
          %v1396 = vpack.c.b16 %v1326, %v1324
          %v1397 = vpack.c.b16 %v1327, %v1325
          %v1398 = vpack.c.b16 %v1330, %v1328
          %v1399 = vpack.c.b16 %v1331, %v1329
          %v1400 = vpack.c.b16 %v1334, %v1332
          %v1401 = vpack.c.b16 %v1335, %v1333
          %v1402 = vpack.c.b16 %v1338, %v1336
          %v1403 = vpack.c.b16 %v1339, %v1337
          %1468 = vmatprep.subr.bf16.mxu0 %v1341
          %1469 = vmatpush1.bf16.msra.mxu0 %v1340
          %1470 = vmatprep.subr.bf16.mxu0 %v1343
          %1471 = vmatpush1.bf16.msra.mxu0 %v1342
          %1472 = vmatprep.subr.bf16.mxu0 %v1345
          %1473 = vmatpush1.bf16.msra.mxu0 %v1344
          %1474 = vmatprep.subr.bf16.mxu0 %v1347
          %1475 = vmatpush1.bf16.msra.mxu0 %v1346
          %1476 = vmatprep.subr.bf16.mxu0 %v1349
          %1477 = vmatpush1.bf16.msra.mxu0 %v1348
          %1478 = vmatprep.subr.bf16.mxu0 %v1351
          %1479 = vmatpush1.bf16.msra.mxu0 %v1350
          %1480 = vmatprep.subr.bf16.mxu0 %v1353
          %1481 = vmatpush1.bf16.msra.mxu0 %v1352
          %1482 = vmatprep.subr.bf16.mxu0 %v1355
          %1483 = vmatpush1.bf16.msra.mxu0 %v1354
          %1484 = vmatprep.subr.bf16.mxu0 %v1357
          %1485 = vmatpush1.bf16.msra.mxu0 %v1356
          %1486 = vmatprep.subr.bf16.mxu0 %v1359
          %1487 = vmatpush1.bf16.msra.mxu0 %v1358
          %1488 = vmatprep.subr.bf16.mxu0 %v1361
          %1489 = vmatpush1.bf16.msra.mxu0 %v1360
          %1490 = vmatprep.subr.bf16.mxu0 %v1363
          %1491 = vmatpush1.bf16.msra.mxu0 %v1362
          %1492 = vmatprep.subr.bf16.mxu0 %v1365
          %1493 = vmatpush1.bf16.msra.mxu0 %v1364
          %1494 = vmatprep.subr.bf16.mxu0 %v1367
          %1495 = vmatpush1.bf16.msra.mxu0 %v1366
          %1496 = vmatprep.subr.bf16.mxu0 %v1369
          %1497 = vmatpush1.bf16.msra.mxu0 %v1368
          %1498 = vmatprep.subr.bf16.mxu0 %v1371
          %1499 = vmatpush1.bf16.msra.mxu0 %v1370
          %1500 = vmatprep.mubr.bf16.mxu0 %v1069
          %1501 = vmatmul.mubr.bf16.gmra.mrb[0].mxu0 %v1068
          %v1502 = vpop.f32.mrb[0].mxu0
          %v1503 = vadd.f32 %v1141, %v1502
          %v1504 = vpop.f32.mrb[0].mxu0
          %v1505 = vadd.f32 %v1145, %v1504
          %v1506 = vpop.f32.mrb[0].mxu0
          %v1507 = vpop.f32.mrb[0].mxu0
          %1508 = vdwg.mxu0
          %1509 = vmatprep.subr.bf16.mxu0 %v1373
          %1510 = vmatpush1.bf16.msra.mxu0 %v1372
          %1511 = vmatprep.subr.bf16.mxu0 %v1375
          %1512 = vmatpush1.bf16.msra.mxu0 %v1374
          %1513 = vmatprep.subr.bf16.mxu0 %v1377
          %1514 = vmatpush1.bf16.msra.mxu0 %v1376
          %1515 = vmatprep.subr.bf16.mxu0 %v1379
          %1516 = vmatpush1.bf16.msra.mxu0 %v1378
          %1517 = vmatprep.subr.bf16.mxu0 %v1381
          %1518 = vmatpush1.bf16.msra.mxu0 %v1380
          %1519 = vmatprep.subr.bf16.mxu0 %v1383
          %1520 = vmatpush1.bf16.msra.mxu0 %v1382
          %1521 = vmatprep.subr.bf16.mxu0 %v1385
          %1522 = vmatpush1.bf16.msra.mxu0 %v1384
          %1523 = vmatprep.subr.bf16.mxu0 %v1387
          %1524 = vmatpush1.bf16.msra.mxu0 %v1386
          %1525 = vmatprep.subr.bf16.mxu0 %v1389
          %1526 = vmatpush1.bf16.msra.mxu0 %v1388
          %1527 = vmatprep.subr.bf16.mxu0 %v1391
          %1528 = vmatpush1.bf16.msra.mxu0 %v1390
          %1529 = vmatprep.subr.bf16.mxu0 %v1393
          %1530 = vmatpush1.bf16.msra.mxu0 %v1392
          %1531 = vmatprep.subr.bf16.mxu0 %v1395
          %1532 = vmatpush1.bf16.msra.mxu0 %v1394
          %1533 = vmatprep.subr.bf16.mxu0 %v1397
          %1534 = vmatpush1.bf16.msra.mxu0 %v1396
          %1535 = vmatprep.subr.bf16.mxu0 %v1399
          %1536 = vmatpush1.bf16.msra.mxu0 %v1398
          %1537 = vmatprep.subr.bf16.mxu0 %v1401
          %1538 = vmatpush1.bf16.msra.mxu0 %v1400
          %1539 = vmatprep.subr.bf16.mxu0 %v1403
          %1540 = vmatpush1.bf16.msra.mxu0 %v1402
          %1541 = vmatprep.mubr.bf16.mxu0 %v1071
          %1542 = vmatmul.mubr.bf16.gmra.mrb[0].mxu0 %v1070
          %v1543 = vpop.f32.mrb[0].mxu0
          %v1544 = vadd.f32 %v1503, %v1543
          %v1545 = vpop.f32.mrb[0].mxu0
          %v1546 = vadd.f32 %v1505, %v1545
          %v1547 = vpop.f32.mrb[0].mxu0
          %v1548 = vpop.f32.mrb[0].mxu0
          %1549 = vdwg.mxu0
          %v1550 = vld [vmem:[%s478] sm:$0x3]
          %v1551 = vmul.f32 %v1546, 0.5
          %v1552 = vmul.f32 %v1551, 1.442695
          %v1553 = vpow.pop %v1552
          %v1554 = vmul.f32 %v1550, %v1553
          %v1555 = vadd.f32 %v1544, %v1554
          %v1556 = vpack.c.bf16 %v1555, %v1555
          %v1557 = vld [vmem:[#allocation9] sm:$0xff]
          %v1558 = vld [vmem:[#allocation9 + $0x8] sm:$0xff]
          %v1559 = vld [vmem:[#allocation9 + $0x10] sm:$0xff]
          %v1560 = vld [vmem:[#allocation9 + $0x18] sm:$0xff]
          %v1561 = vld [vmem:[#allocation9 + $0x20] sm:$0xff]
          %v1562 = vld [vmem:[#allocation9 + $0x28] sm:$0xff]
          %v1563 = vld [vmem:[#allocation9 + $0x30] sm:$0xff]
          %v1564 = vld [vmem:[#allocation9 + $0x38] sm:$0xff]
          %v1565 = vld [vmem:[#allocation9 + $0x40] sm:$0xff]
          %v1566 = vld [vmem:[#allocation9 + $0x48] sm:$0xff]
          %v1567 = vld [vmem:[#allocation9 + $0x50] sm:$0xff]
          %v1568 = vld [vmem:[#allocation9 + $0x58] sm:$0xff]
          %v1569 = vld [vmem:[#allocation9 + $0x60] sm:$0xff]
          %v1570 = vld [vmem:[#allocation9 + $0x68] sm:$0xff]
          %v1571 = vld [vmem:[#allocation9 + $0x70] sm:$0xff]
          %v1572 = vld [vmem:[#allocation9 + $0x78] sm:$0xff]
          %v1573 = vld [vmem:[#allocation9 + $0x80] sm:$0xff]
          %v1574 = vld [vmem:[#allocation9 + $0x88] sm:$0xff]
          %v1575 = vld [vmem:[#allocation9 + $0x90] sm:$0xff]
          %v1576 = vld [vmem:[#allocation9 + $0x98] sm:$0xff]
          %v1577 = vld [vmem:[#allocation9 + $0xa0] sm:$0xff]
          %v1578 = vld [vmem:[#allocation9 + $0xa8] sm:$0xff]
          %v1579 = vld [vmem:[#allocation9 + $0xb0] sm:$0xff]
          %v1580 = vld [vmem:[#allocation9 + $0xb8] sm:$0xff]
          %v1581 = vld [vmem:[#allocation9 + $0xc0] sm:$0xff]
          %v1582 = vld [vmem:[#allocation9 + $0xc8] sm:$0xff]
          %v1583 = vld [vmem:[#allocation9 + $0xd0] sm:$0xff]
          %v1584 = vld [vmem:[#allocation9 + $0xd8] sm:$0xff]
          %v1585 = vld [vmem:[#allocation9 + $0xe0] sm:$0xff]
          %v1586 = vld [vmem:[#allocation9 + $0xe8] sm:$0xff]
          %v1587 = vld [vmem:[#allocation9 + $0xf0] sm:$0xff]
          %v1588 = vld [vmem:[#allocation9 + $0xf8] sm:$0xff]
          %v1589 = vld [vmem:[%s7] sm:$0xf]
          %v1591 = vlaneseq
          %v1592 = vshrl.u32 %v1591, 7
          %v1593 = vsub.s32 0, %v1592
          %v1594 = vrot.slane %v1589, %v1593
          %v1595 = vlaneseq
          %v1596 = vshrl.u32 %v1595, 7
          %v1597 = vsub.s32 1, %v1596
          %v1598 = vrot.slane %v1589, %v1597
          %v1599 = vlaneseq
          %v1600 = vshrl.u32 %v1599, 7
          %v1601 = vsub.s32 2, %v1600
          %v1602 = vrot.slane %v1589, %v1601
          %v1603 = vlaneseq
          %v1604 = vshrl.u32 %v1603, 7
          %v1605 = vsub.s32 3, %v1604
          %v1606 = vrot.slane %v1589, %v1605
          %v1643 = vunpack.c.l.b16 %v1557
          %v1644 = vunpack.c.h.b16 %v1557
          %v1645 = vunpack.c.l.b16 %v1558
          %v1646 = vunpack.c.h.b16 %v1558
          %v1647 = vunpack.c.l.b16 %v1559
          %v1648 = vunpack.c.h.b16 %v1559
          %v1649 = vunpack.c.l.b16 %v1560
          %v1650 = vunpack.c.h.b16 %v1560
          %v1651 = vunpack.c.l.b16 %v1561
          %v1652 = vunpack.c.h.b16 %v1561
          %v1653 = vunpack.c.l.b16 %v1562
          %v1654 = vunpack.c.h.b16 %v1562
          %v1655 = vunpack.c.l.b16 %v1563
          %v1656 = vunpack.c.h.b16 %v1563
          %v1657 = vunpack.c.l.b16 %v1564
          %v1658 = vunpack.c.h.b16 %v1564
          %v1659 = vunpack.c.l.b16 %v1565
          %v1660 = vunpack.c.h.b16 %v1565
          %v1661 = vunpack.c.l.b16 %v1566
          %v1662 = vunpack.c.h.b16 %v1566
          %v1663 = vunpack.c.l.b16 %v1567
          %v1664 = vunpack.c.h.b16 %v1567
          %v1665 = vunpack.c.l.b16 %v1568
          %v1666 = vunpack.c.h.b16 %v1568
          %v1667 = vunpack.c.l.b16 %v1569
          %v1668 = vunpack.c.h.b16 %v1569
          %v1669 = vunpack.c.l.b16 %v1570
          %v1670 = vunpack.c.h.b16 %v1570
          %v1671 = vunpack.c.l.b16 %v1571
          %v1672 = vunpack.c.h.b16 %v1571
          %v1673 = vunpack.c.l.b16 %v1572
          %v1674 = vunpack.c.h.b16 %v1572
          %v1675 = vunpack.c.l.b16 %v1573
          %v1676 = vunpack.c.h.b16 %v1573
          %v1677 = vunpack.c.l.b16 %v1574
          %v1678 = vunpack.c.h.b16 %v1574
          %v1679 = vunpack.c.l.b16 %v1575
          %v1680 = vunpack.c.h.b16 %v1575
          %v1681 = vunpack.c.l.b16 %v1576
          %v1682 = vunpack.c.h.b16 %v1576
          %v1683 = vunpack.c.l.b16 %v1577
          %v1684 = vunpack.c.h.b16 %v1577
          %v1685 = vunpack.c.l.b16 %v1578
          %v1686 = vunpack.c.h.b16 %v1578
          %v1687 = vunpack.c.l.b16 %v1579
          %v1688 = vunpack.c.h.b16 %v1579
          %v1689 = vunpack.c.l.b16 %v1580
          %v1690 = vunpack.c.h.b16 %v1580
          %v1691 = vunpack.c.l.b16 %v1581
          %v1692 = vunpack.c.h.b16 %v1581
          %v1693 = vunpack.c.l.b16 %v1582
          %v1694 = vunpack.c.h.b16 %v1582
          %v1695 = vunpack.c.l.b16 %v1583
          %v1696 = vunpack.c.h.b16 %v1583
          %v1697 = vunpack.c.l.b16 %v1584
          %v1698 = vunpack.c.h.b16 %v1584
          %v1699 = vunpack.c.l.b16 %v1585
          %v1700 = vunpack.c.h.b16 %v1585
          %v1701 = vunpack.c.l.b16 %v1586
          %v1702 = vunpack.c.h.b16 %v1586
          %v1703 = vunpack.c.l.b16 %v1587
          %v1704 = vunpack.c.h.b16 %v1587
          %v1705 = vunpack.c.l.b16 %v1588
          %v1706 = vunpack.c.h.b16 %v1588
          %v1707 = vpack.c.b16 %v1647, %v1643
          %v1708 = vpack.c.b16 %v1648, %v1644
          %v1709 = vpack.c.b16 %v1649, %v1645
          %v1710 = vpack.c.b16 %v1650, %v1646
          %v1711 = vpack.c.b16 %v1655, %v1651
          %v1712 = vpack.c.b16 %v1656, %v1652
          %v1713 = vpack.c.b16 %v1657, %v1653
          %v1714 = vpack.c.b16 %v1658, %v1654
          %v1715 = vpack.c.b16 %v1663, %v1659
          %v1716 = vpack.c.b16 %v1664, %v1660
          %v1717 = vpack.c.b16 %v1665, %v1661
          %v1718 = vpack.c.b16 %v1666, %v1662
          %v1719 = vpack.c.b16 %v1671, %v1667
          %v1720 = vpack.c.b16 %v1672, %v1668
          %v1721 = vpack.c.b16 %v1673, %v1669
          %v1722 = vpack.c.b16 %v1674, %v1670
          %v1723 = vpack.c.b16 %v1679, %v1675
          %v1724 = vpack.c.b16 %v1680, %v1676
          %v1725 = vpack.c.b16 %v1681, %v1677
          %v1726 = vpack.c.b16 %v1682, %v1678
          %v1727 = vpack.c.b16 %v1687, %v1683
          %v1728 = vpack.c.b16 %v1688, %v1684
          %v1729 = vpack.c.b16 %v1689, %v1685
          %v1730 = vpack.c.b16 %v1690, %v1686
          %v1731 = vpack.c.b16 %v1695, %v1691
          %v1732 = vpack.c.b16 %v1696, %v1692
          %v1733 = vpack.c.b16 %v1697, %v1693
          %v1734 = vpack.c.b16 %v1698, %v1694
          %v1735 = vpack.c.b16 %v1703, %v1699
          %v1736 = vpack.c.b16 %v1704, %v1700
          %v1737 = vpack.c.b16 %v1705, %v1701
          %v1738 = vpack.c.b16 %v1706, %v1702
          %1771 = vmatprep.subr.bf16.mxu0 %v1708
          %1772 = vmatpush1.bf16.msra.mxu0 %v1707
          %1773 = vmatprep.subr.bf16.mxu0 %v1712
          %1774 = vmatpush1.bf16.msra.mxu0 %v1711
          %1775 = vmatprep.subr.bf16.mxu0 %v1716
          %1776 = vmatpush1.bf16.msra.mxu0 %v1715
          %1777 = vmatprep.subr.bf16.mxu0 %v1720
          %1778 = vmatpush1.bf16.msra.mxu0 %v1719
          %1779 = vmatprep.subr.bf16.mxu0 %v1724
          %1780 = vmatpush1.bf16.msra.mxu0 %v1723
          %1781 = vmatprep.subr.bf16.mxu0 %v1728
          %1782 = vmatpush1.bf16.msra.mxu0 %v1727
          %1783 = vmatprep.subr.bf16.mxu0 %v1732
          %1784 = vmatpush1.bf16.msra.mxu0 %v1731
          %1785 = vmatprep.subr.bf16.mxu0 %v1736
          %1786 = vmatpush1.bf16.msra.mxu0 %v1735
          %1787 = vmatprep.subr.bf16.mxu0 0
          %1788 = vmatpush1.bf16.msra.mxu0 0
          %1789 = vmatprep.subr.bf16.mxu0 0
          %1790 = vmatpush1.bf16.msra.mxu0 0
          %1791 = vmatprep.subr.bf16.mxu0 0
          %1792 = vmatpush1.bf16.msra.mxu0 0
          %1793 = vmatprep.subr.bf16.mxu0 0
          %1794 = vmatpush1.bf16.msra.mxu0 0
          %1795 = vmatprep.subr.bf16.mxu0 0
          %1796 = vmatpush1.bf16.msra.mxu0 0
          %1797 = vmatprep.subr.bf16.mxu0 0
          %1798 = vmatpush1.bf16.msra.mxu0 0
          %1799 = vmatprep.subr.bf16.mxu0 0
          %1800 = vmatpush1.bf16.msra.mxu0 0
          %1801 = vmatprep.subr.bf16.mxu0 0
          %1802 = vmatpush1.bf16.msra.mxu0 0
          %1803 = vmatprep.mubr.bf16.mxu0 0
          %1804 = vmatmul.mubr.bf16.gmra.mrb[0].mxu0 %v1556
          %v1805 = vpop.f32.mrb[0].mxu0
          %v1806 = vadd.f32 %v1594, %v1805
          %v1807 = vpop.f32.mrb[0].mxu0
          %v1808 = vadd.f32 %v1598, %v1807
          %v1809 = vpop.f32.mrb[0].mxu0
          %v1810 = vpop.f32.mrb[0].mxu0
          %1811 = vdwg.mxu0
          %1812 = vmatprep.subr.bf16.mxu0 %v1710
          %1813 = vmatpush1.bf16.msra.mxu0 %v1709
          %1814 = vmatprep.subr.bf16.mxu0 %v1714
          %1815 = vmatpush1.bf16.msra.mxu0 %v1713
          %1816 = vmatprep.subr.bf16.mxu0 %v1718
          %1817 = vmatpush1.bf16.msra.mxu0 %v1717
          %1818 = vmatprep.subr.bf16.mxu0 %v1722
          %1819 = vmatpush1.bf16.msra.mxu0 %v1721
          %1820 = vmatprep.subr.bf16.mxu0 %v1726
          %1821 = vmatpush1.bf16.msra.mxu0 %v1725
          %1822 = vmatprep.subr.bf16.mxu0 %v1730
          %1823 = vmatpush1.bf16.msra.mxu0 %v1729
          %1824 = vmatprep.subr.bf16.mxu0 %v1734
          %1825 = vmatpush1.bf16.msra.mxu0 %v1733
          %1826 = vmatprep.subr.bf16.mxu0 %v1738
          %1827 = vmatpush1.bf16.msra.mxu0 %v1737
          %1828 = vmatprep.subr.bf16.mxu0 0
          %1829 = vmatpush1.bf16.msra.mxu0 0
          %1830 = vmatprep.subr.bf16.mxu0 0
          %1831 = vmatpush1.bf16.msra.mxu0 0
          %1832 = vmatprep.subr.bf16.mxu0 0
          %1833 = vmatpush1.bf16.msra.mxu0 0
          %1834 = vmatprep.subr.bf16.mxu0 0
          %1835 = vmatpush1.bf16.msra.mxu0 0
          %1836 = vmatprep.subr.bf16.mxu0 0
          %1837 = vmatpush1.bf16.msra.mxu0 0
          %1838 = vmatprep.subr.bf16.mxu0 0
          %1839 = vmatpush1.bf16.msra.mxu0 0
          %1840 = vmatprep.subr.bf16.mxu0 0
          %1841 = vmatpush1.bf16.msra.mxu0 0
          %1842 = vmatprep.subr.bf16.mxu0 0
          %1843 = vmatpush1.bf16.msra.mxu0 0
          %1844 = vmatprep.mubr.bf16.mxu0 0
          %1845 = vmatmul.mubr.bf16.gmra.mrb[0].mxu0 %v1556
          %v1846 = vpop.f32.mrb[0].mxu0
          %v1847 = vadd.f32 %v1602, %v1846
          %v1848 = vpop.f32.mrb[0].mxu0
          %v1849 = vadd.f32 %v1606, %v1848
          %v1850 = vpop.f32.mrb[0].mxu0
          %v1851 = vpop.f32.mrb[0].mxu0
          %1852 = vdwg.mxu0
          %v1853 = vmax.f32 %v1806, 0.0
          %v1854 = vmax.f32 %v1808, 0.0
          %v1855 = vmax.f32 %v1847, 0.0
          %v1856 = vmax.f32 %v1849, 0.0
          %v1857 = vpack.c.bf16 %v1853, %v1853
          %v1858 = vpack.c.bf16 %v1854, %v1854
          %v1859 = vpack.c.bf16 %v1855, %v1855
          %v1860 = vpack.c.bf16 %v1856, %v1856
          %v1865 = vcombine.low %v1857, %v1858
          %v1866 = vcombine.low %v1859, %v1860
          %v1868 = vunpack.c.l.s4 1966171168
          %v1869 = vunpack.c.0.s8 %v1868
          %v1870 = vlaneseq
          %v1871 = vshrl.u32 %v1870, 7
          %v1872 = vsub.s32 %v1869, %v1871
          %v1873 = vrot.slane %v1865, %v1872
          %v1875 = vunpack.c.l.s4 1966171168
          %v1876 = vunpack.c.0.s8 %v1875
          %v1877 = vlaneseq
          %v1878 = vshrl.u32 %v1877, 7
          %v1879 = vsub.s32 %v1876, %v1878
          %v1880 = vrot.slane %v1866, %v1879
          %v1881 = vcombine.low %v1873, %v1880
          %v1883 = vunpack.c.l.s4 1966171168
          %v1884 = vunpack.c.0.s8 %v1883
          %v1885 = vlaneseq
          %v1886 = vshrl.u32 %v1885, 7
          %v1887 = vsub.s32 %v1884, %v1886
          %v1888 = vrot.slane %v1881, %v1887
          %1890 = vst [vmem:[#allocation11] sm:$0xf] %v1888
          %v1893 = vcombine.low %v1544, %v1546
          %v1895 = vunpack.c.l.s4 1983009808
          %v1896 = vunpack.c.0.s8 %v1895
          %v1897 = vlaneseq
          %v1898 = vshrl.u32 %v1897, 7
          %v1899 = vsub.s32 %v1896, %v1898
          %v1900 = vrot.slane %v1893, %v1899
          %1902 = vst [vmem:[#allocation12] sm:$0xf] %v1900
          %1903 = vst [vmem:[#allocation14] sm:$0x3] %v1555
        $region76: #{tpu_custom_call.1} parent=51 // pred_fallthru
          _
        // Predicated region
        $region77: #{tpu_custom_call.1} parent=51 // pred_check
          %p1904 = pneg %p246
        $region78: #{tpu_custom_call.1} parent=51 // pred_check_branch
          %1906 = sbr.rel (%p1904) target = $region80
        $region79: #{tpu_custom_call.1} parent=51 // pred_region
          %s1908 = ssub.s32 64, 64
          %1909 = vsyncadd [#allocation5], %s1908
          %s1910 = smul.addr %s35, 4
          %s1911 = smul.addr %s1910, 16
          %s1912 = scalar_lea.hbm %s8, %s1911
          %s1914 = sshll.u32 [#allocation11], 4
          %s1915 = int_to_ptr.vmem [resolvable:$true] %s1914
          %1917 = dma.vmem_to_hbm [thread:$0]  %s1915, 64, %s1912, [#allocation5]
        $region80: #{tpu_custom_call.1} parent=51 // pred_fallthru
          _
        // Predicated region
        $region81: #{tpu_custom_call.1} parent=51 // pred_check
          %p1918 = pneg %p272
        $region82: #{tpu_custom_call.1} parent=51 // pred_check_branch
          %1920 = sbr.rel (%p1918) target = $region84
        $region83: #{tpu_custom_call.1} parent=51 // pred_region
          %s1922 = ssub.s32 64, 64
          %1923 = vsyncadd [#allocation13], %s1922
          %s1924 = smul.addr %s35, 2
          %s1925 = smul.addr %s1924, 32
          %s1926 = scalar_lea.hbm %s9, %s1925
          %s1928 = sshll.u32 [#allocation12], 4
          %s1929 = int_to_ptr.vmem [resolvable:$true] %s1928
          %1931 = dma.vmem_to_hbm [thread:$0]  %s1929, 64, %s1926, [#allocation13]
        $region84: #{tpu_custom_call.1} parent=51 // pred_fallthru
          _
        // Predicated region
        $region85: #{tpu_custom_call.1} parent=51 // pred_check
          %p1932 = pneg %p298
        $region86: #{tpu_custom_call.1} parent=51 // pred_check_branch
          %1934 = sbr.rel (%p1932) target = $region88
        $region87: #{tpu_custom_call.1} parent=51 // pred_region
          %s1936 = ssub.s32 32, 32
          %1937 = vsyncadd [#allocation13], %s1936
          %s1938 = smul.addr %s35, 32
          %s1939 = scalar_lea.hbm %s10, %s1938
          %s1941 = sshll.u32 [#allocation14], 4
          %s1942 = int_to_ptr.vmem [resolvable:$true] %s1941
          %1944 = dma.vmem_to_hbm [thread:$0]  %s1942, 32, %s1939, [#allocation13]
        $region88: #{tpu_custom_call.1} parent=51 // pred_fallthru
          _
        // Predicated region
        $region89: #{tpu_custom_call.1} parent=51 // pred_check
          %p1945 = pneg %p246
        $region90: #{tpu_custom_call.1} parent=51 // pred_check_branch
          %1947 = sbr.rel (%p1945) target = $region92
        $region91: #{tpu_custom_call.1} parent=51 // pred_region
          %1948 = dma.done [#allocation5], 64
        $region92: #{tpu_custom_call.1} parent=51 // pred_fallthru
          _
        // Predicated region
        $region93: #{tpu_custom_call.1} parent=51 // pred_check
          %p1949 = pneg %p272
        $region94: #{tpu_custom_call.1} parent=51 // pred_check_branch
          %1951 = sbr.rel (%p1949) target = $region96
        $region95: #{tpu_custom_call.1} parent=51 // pred_region
          %1952 = dma.done [#allocation13], 64
        $region96: #{tpu_custom_call.1} parent=51 // pred_fallthru
          _
        // Predicated region
        $region97: #{tpu_custom_call.1} parent=51 // pred_check
          %p1953 = pneg %p298
        $region98: #{tpu_custom_call.1} parent=51 // pred_check_branch
          %1955 = sbr.rel (%p1953) target = $region100
        $region99: #{tpu_custom_call.1} parent=51 // pred_region
          %1956 = dma.done [#allocation13], 32
        $region100: #{tpu_custom_call.1} parent=51 // pred_fallthru
          _
      $region52: #{tpu_custom_call.1} parent=5 // pred_fallthru
        _
      %p1957 = scmp.le.s32.totalorder 2, %s26
      // Predicated region
      $region101: #{tpu_custom_call.1} parent=5 // pred_check
        %p1958 = pneg %p1957
      $region102: #{tpu_custom_call.1} parent=5 // pred_check_branch
        %1960 = sbr.rel (%p1958) target = $region104
      $region103: #{tpu_custom_call.1} parent=5 // pred_region
        %s1961 = ssub.s32 %s26, 2
      $region104: #{tpu_custom_call.1} parent=5 // pred_fallthru
        _
    $region6: #{tpu_custom_call.1} parent=1 // loop_footer
      %s30 = sadd.s32 1, %s26
    $region7: #{tpu_custom_call.1} parent=1 // loop_footer_branch
      %25 = sbr.rel target = $region3
    $region8: #{tpu_custom_call.1} parent=1 // loop_exit
      _
    %1962 = vsyncpa [#allocation4], 1
    %s1963 = scalar_lea.sflag [#allocation4], 1
    %1964 = vsyncpa %s1963, 1
    %1965 = vsyncpa [#allocation7], 1
    %s1966 = scalar_lea.sflag [#allocation7], 1
    %1967 = vsyncpa %s1966, 1
    %1968 = vsyncpa [#allocation10], 1
    %1969 = vsyncpa [#allocation5], 1
    %s1970 = scalar_lea.sflag [#allocation5], 1
    %1971 = vsyncpa %s1970, 1
    %1972 = vsyncpa [#allocation13], 1

</llo_original>
